<compile_context>
chip_gen: v6e
topology: v6e:2x2x1
jax: 0.10.0
libtpu: 0.0.40
codegen_flags: <defaults>
</compile_context>

<pallas_src>
import functools
import math

import numpy as np
import jax
import jax.numpy as jnp
from jax import lax
from jax.experimental import pallas as pl
from jax.experimental.pallas import tpu as pltpu


_TM = 256    # projection rows per grid step (MXU M)
_TN = 512    # projection output-feature tile (MXU N)
_TQ = 256    # attention query rows per grid step
_TK = 512    # attention key/value rows per grid step

_MIN_VMEM = 32 * 1024 * 1024
_MAX_VMEM = 56 * 1024 * 1024


def _vmem_limit(block_bytes, scratch_bytes=0):
    """Scoped-VMEM limit from the actual per-step footprint (double-buffered
    blocks + scratch + slack), clamped to fit all generations (v7x: 64 MiB)."""
    need = 2 * int(block_bytes) + int(scratch_bytes) + (2 << 20)
    return int(min(max(need, _MIN_VMEM), _MAX_VMEM))


# ---------------------------------------------------------------------------
# Kernel 1/3: fused QKV projection -> (3, B*S, D) slab (head-major last dim).
# ---------------------------------------------------------------------------
def _qkv_proj_kernel(x_ref, w_ref, b_ref, o_ref):
    acc = jnp.dot(x_ref[...], w_ref[0], preferred_element_type=jnp.float32)
    o_ref[0] = (acc + b_ref[0]).astype(o_ref.dtype)


def _qkv_proj(x2d, w3, b3, *, out_dtype):
    """x2d: (M, D). w3: (3, D, D) = [wq*scale, wk, wv] bf16. b3: (3, 1, D) f32.
    Returns (3, M, D)."""
    M, D = x2d.shape
    tm = min(M, _TM)
    tn = min(D, _TN)
    grid = (pl.cdiv(M, tm), 3, pl.cdiv(D, tn))

    block_bytes = (tm * D * x2d.dtype.itemsize
                   + D * tn * w3.dtype.itemsize
                   + tn * b3.dtype.itemsize
                   + tm * tn * np.dtype(out_dtype).itemsize)
    cost = pl.CostEstimate(
        flops=int(2 * M * D * 3 * D), transcendentals=0,
        bytes_accessed=int(x2d.size * x2d.dtype.itemsize
                           + w3.size * w3.dtype.itemsize
                           + b3.size * b3.dtype.itemsize
                           + 3 * M * D * np.dtype(out_dtype).itemsize))

    return pl.pallas_call(
        _qkv_proj_kernel,
        out_shape=jax.ShapeDtypeStruct((3, M, D), out_dtype),
        grid_spec=pltpu.PrefetchScalarGridSpec(
            num_scalar_prefetch=0,
            grid=grid,
            in_specs=[
                # Activations: index invariant across (c, j) -> fetched once
                # per row tile by the pipeline.
                pl.BlockSpec((tm, D), lambda i, c, j: (i, 0)),
                # Weight / bias: d_out-tiled so the resident weight block stays
                # bounded (v7x 64 MiB VMEM) while keeping MXU N near 256-512.
                pl.BlockSpec((1, D, tn), lambda i, c, j: (c, 0, j)),
                pl.BlockSpec((1, 1, tn), lambda i, c, j: (c, 0, j)),
            ],
            out_specs=pl.BlockSpec((1, tm, tn), lambda i, c, j: (c, i, j)),
        ),
        compiler_params=pltpu.CompilerParams(
            dimension_semantics=("parallel", "parallel", "parallel"),
            vmem_limit_bytes=_vmem_limit(block_bytes)),
        cost_estimate=cost,
    )(x2d, w3, b3)


# ---------------------------------------------------------------------------
# Kernel 3/3: output projection  y = x @ W + b  (rows x d_out tiles).
# ---------------------------------------------------------------------------
def _linear_kernel(x_ref, w_ref, b_ref, o_ref):
    acc = jnp.dot(x_ref[...], w_ref[...], preferred_element_type=jnp.float32)
    o_ref[...] = (acc + b_ref[...]).astype(o_ref.dtype)


def _out_proj(x2d, w, b2d, *, out_dtype):
    M, D = x2d.shape
    d_out = w.shape[1]
    tm = min(M, _TM)
    tn = min(d_out, _TN)
    grid = (pl.cdiv(M, tm), pl.cdiv(d_out, tn))

    block_bytes = (tm * D * x2d.dtype.itemsize
                   + D * tn * w.dtype.itemsize
                   + tn * b2d.dtype.itemsize
                   + tm * tn * np.dtype(out_dtype).itemsize)
    cost = pl.CostEstimate(
        flops=int(2 * M * D * d_out), transcendentals=0,
        bytes_accessed=int(x2d.size * x2d.dtype.itemsize
                           + w.size * w.dtype.itemsize
                           + b2d.size * b2d.dtype.itemsize
                           + M * d_out * np.dtype(out_dtype).itemsize))

    return pl.pallas_call(
        _linear_kernel,
        out_shape=jax.ShapeDtypeStruct((M, d_out), out_dtype),
        grid_spec=pltpu.PrefetchScalarGridSpec(
            num_scalar_prefetch=0,
            grid=grid,
            in_specs=[
                pl.BlockSpec((tm, D), lambda i, j: (i, 0)),
                # NOTE(perf): weight/bias are invariant along i; on VMEM-tight
                # configs they could use pipeline_mode=pl.Buffered(1).
                pl.BlockSpec((D, tn), lambda i, j: (0, j)),
                pl.BlockSpec((1, tn), lambda i, j: (0, j)),
            ],
            out_specs=pl.BlockSpec((tm, tn), lambda i, j: (i, j)),
        ),
        compiler_params=pltpu.CompilerParams(
            dimension_semantics=("parallel", "parallel"),
            vmem_limit_bytes=_vmem_limit(block_bytes)),
        cost_estimate=cost,
    )(x2d, w, b2d)


# ---------------------------------------------------------------------------
# Kernel 2/3: flash attention, all heads per grid step, online softmax.
#   grid = (B, q-blocks, kv-blocks); kv axis is the reduction.
# ---------------------------------------------------------------------------
def _flash_attn_kernel(q_ref, k_ref, v_ref, o_ref, m_sc, l_sc, acc_sc, *,
                       num_heads, head_dim, seq_len, block_k):
    ki = pl.program_id(2)

    @pl.when(ki == 0)
    def _():
        m_sc[...] = jnp.full(m_sc.shape, -jnp.inf, m_sc.dtype)
        l_sc[...] = jnp.zeros(l_sc.shape, l_sc.dtype)
        acc_sc[...] = jnp.zeros(acc_sc.shape, acc_sc.dtype)

    q = q_ref[0, 0]   # (tq, D) -- all heads, lane-major
    k = k_ref[0, 0]   # (tk, D)
    v = v_ref[0, 0]   # (tk, D)

    mask_tail = (seq_len % block_k) != 0          # static Python bool
    if mask_tail:
        col = lax.broadcasted_iota(jnp.int32, (1, block_k), 1)
        valid_col = (ki * block_k + col) < seq_len        # (1, tk)
        row = lax.broadcasted_iota(jnp.int32, (block_k, 1), 0)
        valid_row = (ki * block_k + row) < seq_len        # (tk, 1)

    # Static per-head loop: head indexing via in-VMEM lane slices, so no XLA
    # (B,S,H,hd) transposes are ever materialized in HBM.
    for h in range(num_heads):
        lo = h * head_dim
        hi = lo + head_dim
        qh, kh, vh = q[:, lo:hi], k[:, lo:hi], v[:, lo:hi]

        # scores = qh @ kh^T (1/sqrt(hd) already folded into the Q weights);
        # contract the last dims so no explicit transpose is materialized.
        s = lax.dot_general(qh, kh, (((1,), (1,)), ((), ())),
                            preferred_element_type=jnp.float32)   # (tq, tk)
        if mask_tail:
            s = jnp.where(valid_col, s, -jnp.inf)
            vh = jnp.where(valid_row, vh, jnp.zeros_like(vh))

        m_prev = m_sc[h]                                           # (tq, 1)
        m_new = jnp.maximum(m_prev, jnp.max(s, axis=-1, keepdims=True))
        alpha = jnp.exp(m_prev - m_new)
        p = jnp.exp(s - m_new)
        l_sc[h] = alpha * l_sc[h] + jnp.sum(p, axis=-1, keepdims=True)
        acc_sc[h] = alpha * acc_sc[h] + jnp.dot(
            p.astype(vh.dtype), vh, preferred_element_type=jnp.float32)
        m_sc[h] = m_new

    @pl.when(ki == pl.num_programs(2) - 1)
    def _():
        pieces = []
        for h in range(num_heads):
            inv = pl.reciprocal(l_sc[h], approx=True)   # EUP slot, ~free
            pieces.append(acc_sc[h] * inv)
        # Single lane-dense store: last dim is d_model, not head_dim.
        o_ref[0] = jnp.concatenate(pieces, axis=-1).astype(o_ref.dtype)


def _flash_attention(qkv3, batch, seq, d_model, num_heads, *, out_dtype):
    head_dim = d_model // num_heads
    qkv = qkv3.reshape(3, batch, seq, d_model)      # free (contiguous)
    tq = min(seq, _TQ)
    tk = min(seq, _TK)
    grid = (batch, pl.cdiv(seq, tq), pl.cdiv(seq, tk))

    elt = np.dtype(out_dtype).itemsize
    block_bytes = (tq * d_model + 2 * tk * d_model + tq * d_model) * elt
    scratch_bytes = num_heads * tq * (head_dim + 2) * 4
    cost = pl.CostEstimate(
        flops=int(4 * batch * num_heads * seq * seq * head_dim),
        transcendentals=int(batch * num_heads * seq * seq),
        bytes_accessed=int(4 * batch * seq * d_model * elt))

    kernel = functools.partial(
        _flash_attn_kernel, num_heads=num_heads, head_dim=head_dim,
        seq_len=seq, block_k=tk)

    # Q/K/V are three views of the same (3, B, S, D) slab (no HBM copies).
    qspec = pl.BlockSpec((1, 1, tq, d_model), lambda b, qi, ki: (0, b, qi, 0))
    kspec = pl.BlockSpec((1, 1, tk, d_model), lambda b, qi, ki: (1, b, ki, 0))
    # NOTE(perf, v5e): if DMA is exposed at small head_dim, K/V specs can use
    # pipeline_mode=pl.Buffered(3).
    vspec = pl.BlockSpec((1, 1, tk, d_model), lambda b, qi, ki: (2, b, ki, 0))

    return pl.pallas_call(
        kernel,
        out_shape=jax.ShapeDtypeStruct((batch, seq, d_model), out_dtype),
        grid_spec=pltpu.PrefetchScalarGridSpec(
            num_scalar_prefetch=0,
            grid=grid,
            in_specs=[qspec, kspec, vspec],
            out_specs=pl.BlockSpec((1, tq, d_model),
                                   lambda b, qi, ki: (b, qi, 0)),
            scratch_shapes=[
                pltpu.VMEM((num_heads, tq, 1), jnp.float32),          # run. max
                pltpu.VMEM((num_heads, tq, 1), jnp.float32),          # run. denom
                pltpu.VMEM((num_heads, tq, head_dim), jnp.float32),   # accum
            ],
        ),
        compiler_params=pltpu.CompilerParams(
            dimension_semantics=("parallel", "parallel", "arbitrary"),
            vmem_limit_bytes=_vmem_limit(block_bytes, scratch_bytes)),
        cost_estimate=cost,
    )(qkv, qkv, qkv)


# ---------------------------------------------------------------------------
# Parameter prep (one-time, hoisted out of the forward) + full forward pass.
# ---------------------------------------------------------------------------
def prepare_params(params, num_heads, *, compute_dtype=jnp.bfloat16):
    """Fuse/cast parameters once: stack Wq/Wk/Wv into a (3, D, D) slab with
    1/sqrt(head_dim) folded into the Q weight/bias; weights in bf16, biases f32."""
    D = params["wq"].shape[0]
    head_dim = D // num_heads
    scale = 1.0 / math.sqrt(head_dim)
    w3 = jnp.stack([params["wq"] * scale, params["wk"], params["wv"]],
                   axis=0).astype(compute_dtype)                    # (3, D, D)
    b3 = jnp.stack([params["bq"] * scale, params["bk"], params["bv"]],
                   axis=0).reshape(3, 1, D).astype(jnp.float32)     # (3, 1, D)
    return {
        "w_qkv": w3,
        "b_qkv": b3,
        "wo": params["wo"].astype(compute_dtype),
        "bo": params["bo"].reshape(1, D).astype(jnp.float32),
    }


def multi_head_attention(x, prepared, num_heads, *, compute_dtype=jnp.bfloat16):
    """x: (B, S, D) float32. prepared: output of prepare_params()."""
    B, S, D = x.shape
    x2d = x.reshape(B * S, D).astype(compute_dtype)

    qkv3 = _qkv_proj(x2d, prepared["w_qkv"], prepared["b_qkv"],
                     out_dtype=compute_dtype)                        # (3, B*S, D)
    o = _flash_attention(qkv3, B, S, D, num_heads,
                         out_dtype=compute_dtype)                    # (B, S, D)
    y = _out_proj(o.reshape(B * S, D), prepared["wo"], prepared["bo"],
                  out_dtype=x.dtype)                                 # (B*S, D)
    return y.reshape(B, S, D)


# ---------------------------------------------------------------------------
# Pure-JAX reference (f32, matches the PyTorch forward in eval mode).
# ---------------------------------------------------------------------------
def reference_mha(x, params, num_heads):
    B, S, D = x.shape
    hd = D // num_heads
    q = x @ params["wq"] + params["bq"]
    k = x @ params["wk"] + params["bk"]
    v = x @ params["wv"] + params["bv"]
    q = q.reshape(B, S, num_heads, hd).transpose(0, 2, 1, 3)
    k = k.reshape(B, S, num_heads, hd).transpose(0, 2, 1, 3)
    v = v.reshape(B, S, num_heads, hd).transpose(0, 2, 1, 3)
    scores = jnp.einsum("bhqd,bhkd->bhqk", q, k) / math.sqrt(hd)
    attn = jax.nn.softmax(scores, axis=-1)
    out = jnp.einsum("bhqk,bhkd->bhqd", attn, v)
    out = out.transpose(0, 2, 1, 3).reshape(B, S, D)
    return out @ params["wo"] + params["bo"]


def init_params(key, d_model):
    """Deterministic init mimicking nn.Linear (uniform +/- 1/sqrt(fan_in));
    weights stored as (D_in, D_out), i.e. torch weight transposed."""
    bound = 1.0 / math.sqrt(d_model)
    keys = jax.random.split(key, 8)

    def w(k):
        return jax.random.uniform(k, (d_model, d_model), jnp.float32, -bound, bound)

    def b(k):
        return jax.random.uniform(k, (d_model,), jnp.float32, -bound, bound)

    return {
        "wq": w(keys[0]), "bq": b(keys[1]),
        "wk": w(keys[2]), "bk": b(keys[3]),
        "wv": w(keys[4]), "bv": b(keys[5]),
        "wo": w(keys[6]), "bo": b(keys[7]),
    }


if __name__ == "__main__":
    B, S, D, H = 2, 8, 32, 4   # batch, seq, d_model, num_heads

    key = jax.random.PRNGKey(0)
    kx, kp = jax.random.split(key)
    x = jax.random.normal(kx, (B, S, D), jnp.float32)
    params = init_params(kp, D)

    prepared = prepare_params(params, H)           # one-time fusion/cast
    fwd = jax.jit(functools.partial(multi_head_attention, num_heads=H))

    out = fwd(x, prepared)
    out = jax.block_until_ready(out)

    ref = reference_mha(x, params, H)
    assert out.shape == (B, S, D)
    # bf16 operands (f32 accumulation) + approx reciprocal -> loosened tolerance
    # versus the pure-f32 reference.
    err = jnp.max(jnp.abs(out - ref))
    assert jnp.allclose(out, ref, atol=5e-2, rtol=5e-2), f"max abs err = {err}"

    print("KERNEL_OK")
</pallas_src>

<mosaic_0001>
module attributes {stable_mosaic.version = 11 : i64} {
  func.func @_linear_kernel(%arg0: i32, %arg1: i32, %arg2: memref<16x32xbf16, #tpu.memory_space<vmem>>, %arg3: memref<32x32xbf16, #tpu.memory_space<vmem>>, %arg4: memref<1x32xf32, #tpu.memory_space<vmem>>, %arg5: memref<16x32xf32, #tpu.memory_space<vmem>>) attributes {dimension_semantics = [#tpu.dimension_semantics<parallel>, #tpu.dimension_semantics<parallel>], iteration_bounds = array<i64: 1, 1>, scalar_prefetch = 0 : i64, scratch_operands = 0 : i64, tpu.core_type = #tpu.core_type<tc>, window_params = [{transform_indices = @transform_0, window_bounds = array<i64: 16, 32>}, {transform_indices = @transform_1, window_bounds = array<i64: 32, 32>}, {transform_indices = @transform_2, window_bounds = array<i64: 1, 32>}, {transform_indices = @transform_3, window_bounds = array<i64: 16, 32>}]} {
    %c0 = arith.constant 0 : index
    %c0_0 = arith.constant 0 : index
    %0 = vector.load %arg2[%c0, %c0_0] : memref<16x32xbf16, #tpu.memory_space<vmem>>, vector<16x32xbf16>
    %c0_1 = arith.constant 0 : index
    %c0_2 = arith.constant 0 : index
    %1 = vector.load %arg3[%c0_1, %c0_2] : memref<32x32xbf16, #tpu.memory_space<vmem>>, vector<32x32xbf16>
    %cst = arith.constant dense<0.000000e+00> : vector<16x32xf32>
    %2 = tpu.matmul %0, %1, %cst {dimension_numbers = #tpu.dot_dimension_numbers<[1], [0], [0], [1], [0, 0, 1, 1], [], []>} : vector<16x32xbf16>, vector<32x32xbf16>, vector<16x32xf32> -> vector<16x32xf32>
    %c0_3 = arith.constant 0 : index
    %c0_4 = arith.constant 0 : index
    %3 = vector.load %arg4[%c0_3, %c0_4] : memref<1x32xf32, #tpu.memory_space<vmem>>, vector<1x32xf32>
    %4 = vector.broadcast %3 : vector<1x32xf32> to vector<16x32xf32>
    %5 = arith.addf %2, %4 : vector<16x32xf32>
    %c0_5 = arith.constant 0 : index
    %c0_6 = arith.constant 0 : index
    %6 = vector.load %arg5[%c0_5, %c0_6] : memref<16x32xf32, #tpu.memory_space<vmem>>, vector<16x32xf32>
    tpu.vector_store %arg5[%c0_5, %c0_6], %5 {strides = array<i32>} : memref<16x32xf32, #tpu.memory_space<vmem>>, vector<16x32xf32>,
    return
  }
  func.func @transform_0(%arg0: i32, %arg1: i32) -> (i32, i32) {
    %c0_i32 = arith.constant 0 : i32
    %c0_i32_0 = arith.constant 0 : i32
    return %arg0, %c0_i32 : i32, i32
  }
  func.func @transform_1(%arg0: i32, %arg1: i32) -> (i32, i32) {
    %c0_i32 = arith.constant 0 : i32
    %c0_i32_0 = arith.constant 0 : i32
    return %c0_i32, %arg1 : i32, i32
  }
  func.func @transform_2(%arg0: i32, %arg1: i32) -> (i32, i32) {
    %c0_i32 = arith.constant 0 : i32
    %c0_i32_0 = arith.constant 0 : i32
    return %c0_i32, %arg1 : i32, i32
  }
  func.func @transform_3(%arg0: i32, %arg1: i32) -> (i32, i32) {
    %c0_i32 = arith.constant 0 : i32
    return %arg0, %arg1 : i32, i32
  }
}

module attributes {stable_mosaic.version = 11 : i64} {
  func.func @_qkv_proj_kernel(%arg0: i32, %arg1: i32, %arg2: i32, %arg3: memref<16x32xbf16, #tpu.memory_space<vmem>>, %arg4: memref<1x32x32xbf16, #tpu.memory_space<vmem>>, %arg5: memref<1x1x32xf32, #tpu.memory_space<vmem>>, %arg6: memref<1x16x32xbf16, #tpu.memory_space<vmem>>) attributes {dimension_semantics = [#tpu.dimension_semantics<parallel>, #tpu.dimension_semantics<parallel>, #tpu.dimension_semantics<parallel>], iteration_bounds = array<i64: 1, 3, 1>, scalar_prefetch = 0 : i64, scratch_operands = 0 : i64, tpu.core_type = #tpu.core_type<tc>, window_params = [{transform_indices = @transform_0, window_bounds = array<i64: 16, 32>}, {transform_indices = @transform_1, window_bounds = array<i64: 1, 32, 32>}, {transform_indices = @transform_2, window_bounds = array<i64: 1, 1, 32>}, {transform_indices = @transform_3, window_bounds = array<i64: 1, 16, 32>}]} {
    %c0 = arith.constant 0 : index
    %c0_0 = arith.constant 0 : index
    %0 = vector.load %arg3[%c0, %c0_0] : memref<16x32xbf16, #tpu.memory_space<vmem>>, vector<16x32xbf16>
    %c0_1 = arith.constant 0 : index
    %c0_2 = arith.constant 0 : index
    %c0_3 = arith.constant 0 : index
    %1 = vector.load %arg4[%c0_1, %c0_2, %c0_3] : memref<1x32x32xbf16, #tpu.memory_space<vmem>>, vector<1x32x32xbf16>
    %2 = vector.shape_cast %1 : vector<1x32x32xbf16> to vector<32x32xbf16>
    %cst = arith.constant dense<0.000000e+00> : vector<16x32xf32>
    %3 = tpu.matmul %0, %2, %cst {dimension_numbers = #tpu.dot_dimension_numbers<[1], [0], [0], [1], [0, 0, 1, 1], [], []>} : vector<16x32xbf16>, vector<32x32xbf16>, vector<16x32xf32> -> vector<16x32xf32>
    %c0_4 = arith.constant 0 : index
    %c0_5 = arith.constant 0 : index
    %c0_6 = arith.constant 0 : index
    %4 = vector.load %arg5[%c0_4, %c0_5, %c0_6] : memref<1x1x32xf32, #tpu.memory_space<vmem>>, vector<1x1x32xf32>
    %5 = vector.shape_cast %4 : vector<1x1x32xf32> to vector<1x32xf32>
    %6 = vector.broadcast %5 : vector<1x32xf32> to vector<16x32xf32>
    %7 = arith.addf %3, %6 : vector<16x32xf32>
    %8 = arith.truncf %7 : vector<16x32xf32> to vector<16x32xbf16>
    %c0_7 = arith.constant 0 : index
    %c0_8 = arith.constant 0 : index
    %c0_9 = arith.constant 0 : index
    %9 = vector.load %arg6[%c0_7, %c0_8, %c0_9] : memref<1x16x32xbf16, #tpu.memory_space<vmem>>, vector<1x16x32xbf16>
    %10 = vector.shape_cast %9 : vector<1x16x32xbf16> to vector<16x32xbf16>
    %11 = vector.shape_cast %8 : vector<16x32xbf16> to vector<1x16x32xbf16>
    tpu.vector_store %arg6[%c0_7, %c0_8, %c0_9], %11 {strides = array<i32>} : memref<1x16x32xbf16, #tpu.memory_space<vmem>>, vector<1x16x32xbf16>,
    return
  }
  func.func @transform_0(%arg0: i32, %arg1: i32, %arg2: i32) -> (i32, i32) {
    %c0_i32 = arith.constant 0 : i32
    %c0_i32_0 = arith.constant 0 : i32
    return %arg0, %c0_i32 : i32, i32
  }
  func.func @transform_1(%arg0: i32, %arg1: i32, %arg2: i32) -> (i32, i32, i32) {
    %c0_i32 = arith.constant 0 : i32
    %c0_i32_0 = arith.constant 0 : i32
    return %arg1, %c0_i32, %arg2 : i32, i32, i32
  }
  func.func @transform_2(%arg0: i32, %arg1: i32, %arg2: i32) -> (i32, i32, i32) {
    %c0_i32 = arith.constant 0 : i32
    %c0_i32_0 = arith.constant 0 : i32
    return %arg1, %c0_i32, %arg2 : i32, i32, i32
  }
  func.func @transform_3(%arg0: i32, %arg1: i32, %arg2: i32) -> (i32, i32, i32) {
    %c0_i32 = arith.constant 0 : i32
    return %arg1, %arg0, %arg2 : i32, i32, i32
  }
}

module attributes {stable_mosaic.version = 11 : i64} {
  func.func @_flash_attn_kernel(%arg0: i32, %arg1: i32, %arg2: i32, %arg3: memref<1x1x8x32xbf16, #tpu.memory_space<vmem>>, %arg4: memref<1x1x8x32xbf16, #tpu.memory_space<vmem>>, %arg5: memref<1x1x8x32xbf16, #tpu.memory_space<vmem>>, %arg6: memref<1x8x32xbf16, #tpu.memory_space<vmem>>, %arg7: memref<4x8x1xf32, #tpu.memory_space<vmem>>, %arg8: memref<4x8x1xf32, #tpu.memory_space<vmem>>, %arg9: memref<4x8x8xf32, #tpu.memory_space<vmem>>) attributes {dimension_semantics = [#tpu.dimension_semantics<parallel>, #tpu.dimension_semantics<parallel>, #tpu.dimension_semantics<arbitrary>], iteration_bounds = array<i64: 2, 1, 1>, scalar_prefetch = 0 : i64, scratch_operands = 3 : i64, tpu.core_type = #tpu.core_type<tc>, window_params = [{transform_indices = @transform_0, window_bounds = array<i64: 1, 1, 8, 32>}, {transform_indices = @transform_1, window_bounds = array<i64: 1, 1, 8, 32>}, {transform_indices = @transform_2, window_bounds = array<i64: 1, 1, 8, 32>}, {transform_indices = @transform_3, window_bounds = array<i64: 1, 8, 32>}]} {
    %c0_i32 = arith.constant 0 : i32
    %0 = arith.cmpi eq, %arg2, %c0_i32 : i32
    %1 = arith.extui %0 : i1 to i32
    %c0_i32_0 = arith.constant 0 : i32
    %2 = arith.cmpi ne, %1, %c0_i32_0 : i32
    scf.if %2 {
      %cst_98 = arith.constant 0xFF800000 : f32
      %156 = vector.broadcast %cst_98 : f32 to vector<4x8x1xf32>
      %c0_99 = arith.constant 0 : index
      %c0_100 = arith.constant 0 : index
      %c0_101 = arith.constant 0 : index
      %157 = vector.load %arg7[%c0_99, %c0_100, %c0_101] : memref<4x8x1xf32, #tpu.memory_space<vmem>>, vector<4x8x1xf32>
      tpu.vector_store %arg7[%c0_99, %c0_100, %c0_101], %156 {strides = array<i32>} : memref<4x8x1xf32, #tpu.memory_space<vmem>>, vector<4x8x1xf32>,
      %cst_102 = arith.constant 0.000000e+00 : f32
      %158 = vector.broadcast %cst_102 : f32 to vector<4x8x1xf32>
      %c0_103 = arith.constant 0 : index
      %c0_104 = arith.constant 0 : index
      %c0_105 = arith.constant 0 : index
      %159 = vector.load %arg8[%c0_103, %c0_104, %c0_105] : memref<4x8x1xf32, #tpu.memory_space<vmem>>, vector<4x8x1xf32>
      tpu.vector_store %arg8[%c0_103, %c0_104, %c0_105], %158 {strides = array<i32>} : memref<4x8x1xf32, #tpu.memory_space<vmem>>, vector<4x8x1xf32>,
      %cst_106 = arith.constant 0.000000e+00 : f32
      %160 = vector.broadcast %cst_106 : f32 to vector<4x8x8xf32>
      %c0_107 = arith.constant 0 : index
      %c0_108 = arith.constant 0 : index
      %c0_109 = arith.constant 0 : index
      %161 = vector.load %arg9[%c0_107, %c0_108, %c0_109] : memref<4x8x8xf32, #tpu.memory_space<vmem>>, vector<4x8x8xf32>
      tpu.vector_store %arg9[%c0_107, %c0_108, %c0_109], %160 {strides = array<i32>} : memref<4x8x8xf32, #tpu.memory_space<vmem>>, vector<4x8x8xf32>,
    } else {
    }
    %c0 = arith.constant 0 : index
    %c0_1 = arith.constant 0 : index
    %c0_2 = arith.constant 0 : index
    %c0_3 = arith.constant 0 : index
    %3 = vector.load %arg3[%c0, %c0_1, %c0_2, %c0_3] : memref<1x1x8x32xbf16, #tpu.memory_space<vmem>>, vector<1x1x8x32xbf16>
    %4 = vector.shape_cast %3 : vector<1x1x8x32xbf16> to vector<8x32xbf16>
    %c0_4 = arith.constant 0 : index
    %c0_5 = arith.constant 0 : index
    %c0_6 = arith.constant 0 : index
    %c0_7 = arith.constant 0 : index
    %5 = vector.load %arg4[%c0_4, %c0_5, %c0_6, %c0_7] : memref<1x1x8x32xbf16, #tpu.memory_space<vmem>>, vector<1x1x8x32xbf16>
    %6 = vector.shape_cast %5 : vector<1x1x8x32xbf16> to vector<8x32xbf16>
    %c0_8 = arith.constant 0 : index
    %c0_9 = arith.constant 0 : index
    %c0_10 = arith.constant 0 : index
    %c0_11 = arith.constant 0 : index
    %7 = vector.load %arg5[%c0_8, %c0_9, %c0_10, %c0_11] : memref<1x1x8x32xbf16, #tpu.memory_space<vmem>>, vector<1x1x8x32xbf16>
    %8 = vector.shape_cast %7 : vector<1x1x8x32xbf16> to vector<8x32xbf16>
    %9 = vector.extract_strided_slice %4 {offsets = [0, 0], sizes = [8, 8], strides = [1, 1]} : vector<8x32xbf16> to vector<8x8xbf16>
    %10 = vector.extract_strided_slice %6 {offsets = [0, 0], sizes = [8, 8], strides = [1, 1]} : vector<8x32xbf16> to vector<8x8xbf16>
    %11 = vector.extract_strided_slice %8 {offsets = [0, 0], sizes = [8, 8], strides = [1, 1]} : vector<8x32xbf16> to vector<8x8xbf16>
    %cst = arith.constant dense<0.000000e+00> : vector<8x8xf32>
    %12 = tpu.matmul %9, %10, %cst {dimension_numbers = #tpu.dot_dimension_numbers<[1], [1], [0], [0], [0, 0, 1, 0], [], []>} : vector<8x8xbf16>, vector<8x8xbf16>, vector<8x8xf32> -> vector<8x8xf32>
    %c0_12 = arith.constant 0 : index
    %c0_13 = arith.constant 0 : index
    %c0_14 = arith.constant 0 : index
    %13 = vector.load %arg7[%c0_12, %c0_13, %c0_14] : memref<4x8x1xf32, #tpu.memory_space<vmem>>, vector<1x8x1xf32>
    %14 = vector.shape_cast %13 : vector<1x8x1xf32> to vector<8x1xf32>
    %cst_15 = arith.constant dense<0xFF800000> : vector<8xf32>
    %15 = vector.multi_reduction <maximumf>, %12, %cst_15 [1] : vector<8x8xf32> to vector<8xf32>
    %16 = vector.shape_cast %15 : vector<8xf32> to vector<8x1xf32>
    %17 = arith.maximumf %14, %16 : vector<8x1xf32>
    %18 = arith.subf %14, %17 : vector<8x1xf32>
    %19 = math.exp %18 : vector<8x1xf32>
    %20 = vector.broadcast %17 : vector<8x1xf32> to vector<8x8xf32>
    %21 = arith.subf %12, %20 : vector<8x8xf32>
    %22 = math.exp %21 : vector<8x8xf32>
    %c0_16 = arith.constant 0 : index
    %c0_17 = arith.constant 0 : index
    %c0_18 = arith.constant 0 : index
    %23 = vector.load %arg8[%c0_16, %c0_17, %c0_18] : memref<4x8x1xf32, #tpu.memory_space<vmem>>, vector<1x8x1xf32>
    %24 = vector.shape_cast %23 : vector<1x8x1xf32> to vector<8x1xf32>
    %25 = arith.mulf %19, %24 : vector<8x1xf32>
    %cst_19 = arith.constant dense<0.000000e+00> : vector<8xf32>
    %26 = vector.multi_reduction <add>, %22, %cst_19 [1] : vector<8x8xf32> to vector<8xf32>
    %27 = vector.shape_cast %26 : vector<8xf32> to vector<8x1xf32>
    %28 = arith.addf %25, %27 : vector<8x1xf32>
    %c0_20 = arith.constant 0 : index
    %c0_21 = arith.constant 0 : index
    %c0_22 = arith.constant 0 : index
    %29 = vector.load %arg8[%c0_20, %c0_21, %c0_22] : memref<4x8x1xf32, #tpu.memory_space<vmem>>, vector<1x8x1xf32>
    %30 = vector.shape_cast %29 : vector<1x8x1xf32> to vector<8x1xf32>
    %31 = vector.shape_cast %28 : vector<8x1xf32> to vector<1x8x1xf32>
    tpu.vector_store %arg8[%c0_20, %c0_21, %c0_22], %31 {strides = array<i32>} : memref<4x8x1xf32, #tpu.memory_space<vmem>>, vector<1x8x1xf32>,
    %c0_23 = arith.constant 0 : index
    %c0_24 = arith.constant 0 : index
    %c0_25 = arith.constant 0 : index
    %32 = vector.load %arg9[%c0_23, %c0_24, %c0_25] : memref<4x8x8xf32, #tpu.memory_space<vmem>>, vector<1x8x8xf32>
    %33 = vector.shape_cast %32 : vector<1x8x8xf32> to vector<8x8xf32>
    %34 = vector.broadcast %19 : vector<8x1xf32> to vector<8x8xf32>
    %35 = arith.mulf %34, %33 : vector<8x8xf32>
    %36 = arith.truncf %22 : vector<8x8xf32> to vector<8x8xbf16>
    %cst_26 = arith.constant dense<0.000000e+00> : vector<8x8xf32>
    %37 = tpu.matmul %36, %11, %cst_26 {dimension_numbers = #tpu.dot_dimension_numbers<[1], [0], [0], [1], [0, 0, 1, 1], [], []>} : vector<8x8xbf16>, vector<8x8xbf16>, vector<8x8xf32> -> vector<8x8xf32>
    %38 = arith.addf %35, %37 : vector<8x8xf32>
    %c0_27 = arith.constant 0 : index
    %c0_28 = arith.constant 0 : index
    %c0_29 = arith.constant 0 : index
    %39 = vector.load %arg9[%c0_27, %c0_28, %c0_29] : memref<4x8x8xf32, #tpu.memory_space<vmem>>, vector<1x8x8xf32>
    %40 = vector.shape_cast %39 : vector<1x8x8xf32> to vector<8x8xf32>
    %41 = vector.shape_cast %38 : vector<8x8xf32> to vector<1x8x8xf32>
    tpu.vector_store %arg9[%c0_27, %c0_28, %c0_29], %41 {strides = array<i32>} : memref<4x8x8xf32, #tpu.memory_space<vmem>>, vector<1x8x8xf32>,
    %c0_30 = arith.constant 0 : index
    %c0_31 = arith.constant 0 : index
    %c0_32 = arith.constant 0 : index
    %42 = vector.load %arg7[%c0_30, %c0_31, %c0_32] : memref<4x8x1xf32, #tpu.memory_space<vmem>>, vector<1x8x1xf32>
    %43 = vector.shape_cast %42 : vector<1x8x1xf32> to vector<8x1xf32>
    %44 = vector.shape_cast %17 : vector<8x1xf32> to vector<1x8x1xf32>
    tpu.vector_store %arg7[%c0_30, %c0_31, %c0_32], %44 {strides = array<i32>} : memref<4x8x1xf32, #tpu.memory_space<vmem>>, vector<1x8x1xf32>,
    %45 = vector.extract_strided_slice %4 {offsets = [0, 8], sizes = [8, 8], strides = [1, 1]} : vector<8x32xbf16> to vector<8x8xbf16>
    %46 = vector.extract_strided_slice %6 {offsets = [0, 8], sizes = [8, 8], strides = [1, 1]} : vector<8x32xbf16> to vector<8x8xbf16>
    %47 = vector.extract_strided_slice %8 {offsets = [0, 8], sizes = [8, 8], strides = [1, 1]} : vector<8x32xbf16> to vector<8x8xbf16>
    %cst_33 = arith.constant dense<0.000000e+00> : vector<8x8xf32>
    %48 = tpu.matmul %45, %46, %cst_33 {dimension_numbers = #tpu.dot_dimension_numbers<[1], [1], [0], [0], [0, 0, 1, 0], [], []>} : vector<8x8xbf16>, vector<8x8xbf16>, vector<8x8xf32> -> vector<8x8xf32>
    %c1 = arith.constant 1 : index
    %c0_34 = arith.constant 0 : index
    %c0_35 = arith.constant 0 : index
    %49 = vector.load %arg7[%c1, %c0_34, %c0_35] : memref<4x8x1xf32, #tpu.memory_space<vmem>>, vector<1x8x1xf32>
    %50 = vector.shape_cast %49 : vector<1x8x1xf32> to vector<8x1xf32>
    %cst_36 = arith.constant dense<0xFF800000> : vector<8xf32>
    %51 = vector.multi_reduction <maximumf>, %48, %cst_36 [1] : vector<8x8xf32> to vector<8xf32>
    %52 = vector.shape_cast %51 : vector<8xf32> to vector<8x1xf32>
    %53 = arith.maximumf %50, %52 : vector<8x1xf32>
    %54 = arith.subf %50, %53 : vector<8x1xf32>
    %55 = math.exp %54 : vector<8x1xf32>
    %56 = vector.broadcast %53 : vector<8x1xf32> to vector<8x8xf32>
    %57 = arith.subf %48, %56 : vector<8x8xf32>
    %58 = math.exp %57 : vector<8x8xf32>
    %c1_37 = arith.constant 1 : index
    %c0_38 = arith.constant 0 : index
    %c0_39 = arith.constant 0 : index
    %59 = vector.load %arg8[%c1_37, %c0_38, %c0_39] : memref<4x8x1xf32, #tpu.memory_space<vmem>>, vector<1x8x1xf32>
    %60 = vector.shape_cast %59 : vector<1x8x1xf32> to vector<8x1xf32>
    %61 = arith.mulf %55, %60 : vector<8x1xf32>
    %cst_40 = arith.constant dense<0.000000e+00> : vector<8xf32>
    %62 = vector.multi_reduction <add>, %58, %cst_40 [1] : vector<8x8xf32> to vector<8xf32>
    %63 = vector.shape_cast %62 : vector<8xf32> to vector<8x1xf32>
    %64 = arith.addf %61, %63 : vector<8x1xf32>
    %c1_41 = arith.constant 1 : index
    %c0_42 = arith.constant 0 : index
    %c0_43 = arith.constant 0 : index
    %65 = vector.load %arg8[%c1_41, %c0_42, %c0_43] : memref<4x8x1xf32, #tpu.memory_space<vmem>>, vector<1x8x1xf32>
    %66 = vector.shape_cast %65 : vector<1x8x1xf32> to vector<8x1xf32>
    %67 = vector.shape_cast %64 : vector<8x1xf32> to vector<1x8x1xf32>
    tpu.vector_store %arg8[%c1_41, %c0_42, %c0_43], %67 {strides = array<i32>} : memref<4x8x1xf32, #tpu.memory_space<vmem>>, vector<1x8x1xf32>,
    %c1_44 = arith.constant 1 : index
    %c0_45 = arith.constant 0 : index
    %c0_46 = arith.constant 0 : index
    %68 = vector.load %arg9[%c1_44, %c0_45, %c0_46] : memref<4x8x8xf32, #tpu.memory_space<vmem>>, vector<1x8x8xf32>
    %69 = vector.shape_cast %68 : vector<1x8x8xf32> to vector<8x8xf32>
    %70 = vector.broadcast %55 : vector<8x1xf32> to vector<8x8xf32>
    %71 = arith.mulf %70, %69 : vector<8x8xf32>
    %72 = arith.truncf %58 : vector<8x8xf32> to vector<8x8xbf16>
    %cst_47 = arith.constant dense<0.000000e+00> : vector<8x8xf32>
    %73 = tpu.matmul %72, %47, %cst_47 {dimension_numbers = #tpu.dot_dimension_numbers<[1], [0], [0], [1], [0, 0, 1, 1], [], []>} : vector<8x8xbf16>, vector<8x8xbf16>, vector<8x8xf32> -> vector<8x8xf32>
    %74 = arith.addf %71, %73 : vector<8x8xf32>
    %c1_48 = arith.constant 1 : index
    %c0_49 = arith.constant 0 : index
    %c0_50 = arith.constant 0 : index
    %75 = vector.load %arg9[%c1_48, %c0_49, %c0_50] : memref<4x8x8xf32, #tpu.memory_space<vmem>>, vector<1x8x8xf32>
    %76 = vector.shape_cast %75 : vector<1x8x8xf32> to vector<8x8xf32>
    %77 = vector.shape_cast %74 : vector<8x8xf32> to vector<1x8x8xf32>
    tpu.vector_store %arg9[%c1_48, %c0_49, %c0_50], %77 {strides = array<i32>} : memref<4x8x8xf32, #tpu.memory_space<vmem>>, vector<1x8x8xf32>,
    %c1_51 = arith.constant 1 : index
    %c0_52 = arith.constant 0 : index
    %c0_53 = arith.constant 0 : index
    %78 = vector.load %arg7[%c1_51, %c0_52, %c0_53] : memref<4x8x1xf32, #tpu.memory_space<vmem>>, vector<1x8x1xf32>
    %79 = vector.shape_cast %78 : vector<1x8x1xf32> to vector<8x1xf32>
    %80 = vector.shape_cast %53 : vector<8x1xf32> to vector<1x8x1xf32>
    tpu.vector_store %arg7[%c1_51, %c0_52, %c0_53], %80 {strides = array<i32>} : memref<4x8x1xf32, #tpu.memory_space<vmem>>, vector<1x8x1xf32>,
    %81 = vector.extract_strided_slice %4 {offsets = [0, 16], sizes = [8, 8], strides = [1, 1]} : vector<8x32xbf16> to vector<8x8xbf16>
    %82 = vector.extract_strided_slice %6 {offsets = [0, 16], sizes = [8, 8], strides = [1, 1]} : vector<8x32xbf16> to vector<8x8xbf16>
    %83 = vector.extract_strided_slice %8 {offsets = [0, 16], sizes = [8, 8], strides = [1, 1]} : vector<8x32xbf16> to vector<8x8xbf16>
    %cst_54 = arith.constant dense<0.000000e+00> : vector<8x8xf32>
    %84 = tpu.matmul %81, %82, %cst_54 {dimension_numbers = #tpu.dot_dimension_numbers<[1], [1], [0], [0], [0, 0, 1, 0], [], []>} : vector<8x8xbf16>, vector<8x8xbf16>, vector<8x8xf32> -> vector<8x8xf32>
    %c2 = arith.constant 2 : index
    %c0_55 = arith.constant 0 : index
    %c0_56 = arith.constant 0 : index
    %85 = vector.load %arg7[%c2, %c0_55, %c0_56] : memref<4x8x1xf32, #tpu.memory_space<vmem>>, vector<1x8x1xf32>
    %86 = vector.shape_cast %85 : vector<1x8x1xf32> to vector<8x1xf32>
    %cst_57 = arith.constant dense<0xFF800000> : vector<8xf32>
    %87 = vector.multi_reduction <maximumf>, %84, %cst_57 [1] : vector<8x8xf32> to vector<8xf32>
    %88 = vector.shape_cast %87 : vector<8xf32> to vector<8x1xf32>
    %89 = arith.maximumf %86, %88 : vector<8x1xf32>
    %90 = arith.subf %86, %89 : vector<8x1xf32>
    %91 = math.exp %90 : vector<8x1xf32>
    %92 = vector.broadcast %89 : vector<8x1xf32> to vector<8x8xf32>
    %93 = arith.subf %84, %92 : vector<8x8xf32>
    %94 = math.exp %93 : vector<8x8xf32>
    %c2_58 = arith.constant 2 : index
    %c0_59 = arith.constant 0 : index
    %c0_60 = arith.constant 0 : index
    %95 = vector.load %arg8[%c2_58, %c0_59, %c0_60] : memref<4x8x1xf32, #tpu.memory_space<vmem>>, vector<1x8x1xf32>
    %96 = vector.shape_cast %95 : vector<1x8x1xf32> to vector<8x1xf32>
    %97 = arith.mulf %91, %96 : vector<8x1xf32>
    %cst_61 = arith.constant dense<0.000000e+00> : vector<8xf32>
    %98 = vector.multi_reduction <add>, %94, %cst_61 [1] : vector<8x8xf32> to vector<8xf32>
    %99 = vector.shape_cast %98 : vector<8xf32> to vector<8x1xf32>
    %100 = arith.addf %97, %99 : vector<8x1xf32>
    %c2_62 = arith.constant 2 : index
    %c0_63 = arith.constant 0 : index
    %c0_64 = arith.constant 0 : index
    %101 = vector.load %arg8[%c2_62, %c0_63, %c0_64] : memref<4x8x1xf32, #tpu.memory_space<vmem>>, vector<1x8x1xf32>
    %102 = vector.shape_cast %101 : vector<1x8x1xf32> to vector<8x1xf32>
    %103 = vector.shape_cast %100 : vector<8x1xf32> to vector<1x8x1xf32>
    tpu.vector_store %arg8[%c2_62, %c0_63, %c0_64], %103 {strides = array<i32>} : memref<4x8x1xf32, #tpu.memory_space<vmem>>, vector<1x8x1xf32>,
    %c2_65 = arith.constant 2 : index
    %c0_66 = arith.constant 0 : index
    %c0_67 = arith.constant 0 : index
    %104 = vector.load %arg9[%c2_65, %c0_66, %c0_67] : memref<4x8x8xf32, #tpu.memory_space<vmem>>, vector<1x8x8xf32>
    %105 = vector.shape_cast %104 : vector<1x8x8xf32> to vector<8x8xf32>
    %106 = vector.broadcast %91 : vector<8x1xf32> to vector<8x8xf32>
    %107 = arith.mulf %106, %105 : vector<8x8xf32>
    %108 = arith.truncf %94 : vector<8x8xf32> to vector<8x8xbf16>
    %cst_68 = arith.constant dense<0.000000e+00> : vector<8x8xf32>
    %109 = tpu.matmul %108, %83, %cst_68 {dimension_numbers = #tpu.dot_dimension_numbers<[1], [0], [0], [1], [0, 0, 1, 1], [], []>} : vector<8x8xbf16>, vector<8x8xbf16>, vector<8x8xf32> -> vector<8x8xf32>
    %110 = arith.addf %107, %109 : vector<8x8xf32>
    %c2_69 = arith.constant 2 : index
    %c0_70 = arith.constant 0 : index
    %c0_71 = arith.constant 0 : index
    %111 = vector.load %arg9[%c2_69, %c0_70, %c0_71] : memref<4x8x8xf32, #tpu.memory_space<vmem>>, vector<1x8x8xf32>
    %112 = vector.shape_cast %111 : vector<1x8x8xf32> to vector<8x8xf32>
    %113 = vector.shape_cast %110 : vector<8x8xf32> to vector<1x8x8xf32>
    tpu.vector_store %arg9[%c2_69, %c0_70, %c0_71], %113 {strides = array<i32>} : memref<4x8x8xf32, #tpu.memory_space<vmem>>, vector<1x8x8xf32>,
    %c2_72 = arith.constant 2 : index
    %c0_73 = arith.constant 0 : index
    %c0_74 = arith.constant 0 : index
    %114 = vector.load %arg7[%c2_72, %c0_73, %c0_74] : memref<4x8x1xf32, #tpu.memory_space<vmem>>, vector<1x8x1xf32>
    %115 = vector.shape_cast %114 : vector<1x8x1xf32> to vector<8x1xf32>
    %116 = vector.shape_cast %89 : vector<8x1xf32> to vector<1x8x1xf32>
    tpu.vector_store %arg7[%c2_72, %c0_73, %c0_74], %116 {strides = array<i32>} : memref<4x8x1xf32, #tpu.memory_space<vmem>>, vector<1x8x1xf32>,
    %117 = vector.extract_strided_slice %4 {offsets = [0, 24], sizes = [8, 8], strides = [1, 1]} : vector<8x32xbf16> to vector<8x8xbf16>
    %118 = vector.extract_strided_slice %6 {offsets = [0, 24], sizes = [8, 8], strides = [1, 1]} : vector<8x32xbf16> to vector<8x8xbf16>
    %119 = vector.extract_strided_slice %8 {offsets = [0, 24], sizes = [8, 8], strides = [1, 1]} : vector<8x32xbf16> to vector<8x8xbf16>
    %cst_75 = arith.constant dense<0.000000e+00> : vector<8x8xf32>
    %120 = tpu.matmul %117, %118, %cst_75 {dimension_numbers = #tpu.dot_dimension_numbers<[1], [1], [0], [0], [0, 0, 1, 0], [], []>} : vector<8x8xbf16>, vector<8x8xbf16>, vector<8x8xf32> -> vector<8x8xf32>
    %c3 = arith.constant 3 : index
    %c0_76 = arith.constant 0 : index
    %c0_77 = arith.constant 0 : index
    %121 = vector.load %arg7[%c3, %c0_76, %c0_77] : memref<4x8x1xf32, #tpu.memory_space<vmem>>, vector<1x8x1xf32>
    %122 = vector.shape_cast %121 : vector<1x8x1xf32> to vector<8x1xf32>
    %cst_78 = arith.constant dense<0xFF800000> : vector<8xf32>
    %123 = vector.multi_reduction <maximumf>, %120, %cst_78 [1] : vector<8x8xf32> to vector<8xf32>
    %124 = vector.shape_cast %123 : vector<8xf32> to vector<8x1xf32>
    %125 = arith.maximumf %122, %124 : vector<8x1xf32>
    %126 = arith.subf %122, %125 : vector<8x1xf32>
    %127 = math.exp %126 : vector<8x1xf32>
    %128 = vector.broadcast %125 : vector<8x1xf32> to vector<8x8xf32>
    %129 = arith.subf %120, %128 : vector<8x8xf32>
    %130 = math.exp %129 : vector<8x8xf32>
    %c3_79 = arith.constant 3 : index
    %c0_80 = arith.constant 0 : index
    %c0_81 = arith.constant 0 : index
    %131 = vector.load %arg8[%c3_79, %c0_80, %c0_81] : memref<4x8x1xf32, #tpu.memory_space<vmem>>, vector<1x8x1xf32>
    %132 = vector.shape_cast %131 : vector<1x8x1xf32> to vector<8x1xf32>
    %133 = arith.mulf %127, %132 : vector<8x1xf32>
    %cst_82 = arith.constant dense<0.000000e+00> : vector<8xf32>
    %134 = vector.multi_reduction <add>, %130, %cst_82 [1] : vector<8x8xf32> to vector<8xf32>
    %135 = vector.shape_cast %134 : vector<8xf32> to vector<8x1xf32>
    %136 = arith.addf %133, %135 : vector<8x1xf32>
    %c3_83 = arith.constant 3 : index
    %c0_84 = arith.constant 0 : index
    %c0_85 = arith.constant 0 : index
    %137 = vector.load %arg8[%c3_83, %c0_84, %c0_85] : memref<4x8x1xf32, #tpu.memory_space<vmem>>, vector<1x8x1xf32>
    %138 = vector.shape_cast %137 : vector<1x8x1xf32> to vector<8x1xf32>
    %139 = vector.shape_cast %136 : vector<8x1xf32> to vector<1x8x1xf32>
    tpu.vector_store %arg8[%c3_83, %c0_84, %c0_85], %139 {strides = array<i32>} : memref<4x8x1xf32, #tpu.memory_space<vmem>>, vector<1x8x1xf32>,
    %c3_86 = arith.constant 3 : index
    %c0_87 = arith.constant 0 : index
    %c0_88 = arith.constant 0 : index
    %140 = vector.load %arg9[%c3_86, %c0_87, %c0_88] : memref<4x8x8xf32, #tpu.memory_space<vmem>>, vector<1x8x8xf32>
    %141 = vector.shape_cast %140 : vector<1x8x8xf32> to vector<8x8xf32>
    %142 = vector.broadcast %127 : vector<8x1xf32> to vector<8x8xf32>
    %143 = arith.mulf %142, %141 : vector<8x8xf32>
    %144 = arith.truncf %130 : vector<8x8xf32> to vector<8x8xbf16>
    %cst_89 = arith.constant dense<0.000000e+00> : vector<8x8xf32>
    %145 = tpu.matmul %144, %119, %cst_89 {dimension_numbers = #tpu.dot_dimension_numbers<[1], [0], [0], [1], [0, 0, 1, 1], [], []>} : vector<8x8xbf16>, vector<8x8xbf16>, vector<8x8xf32> -> vector<8x8xf32>
    %146 = arith.addf %143, %145 : vector<8x8xf32>
    %c3_90 = arith.constant 3 : index
    %c0_91 = arith.constant 0 : index
    %c0_92 = arith.constant 0 : index
    %147 = vector.load %arg9[%c3_90, %c0_91, %c0_92] : memref<4x8x8xf32, #tpu.memory_space<vmem>>, vector<1x8x8xf32>
    %148 = vector.shape_cast %147 : vector<1x8x8xf32> to vector<8x8xf32>
    %149 = vector.shape_cast %146 : vector<8x8xf32> to vector<1x8x8xf32>
    tpu.vector_store %arg9[%c3_90, %c0_91, %c0_92], %149 {strides = array<i32>} : memref<4x8x8xf32, #tpu.memory_space<vmem>>, vector<1x8x8xf32>,
    %c3_93 = arith.constant 3 : index
    %c0_94 = arith.constant 0 : index
    %c0_95 = arith.constant 0 : index
    %150 = vector.load %arg7[%c3_93, %c0_94, %c0_95] : memref<4x8x1xf32, #tpu.memory_space<vmem>>, vector<1x8x1xf32>
    %151 = vector.shape_cast %150 : vector<1x8x1xf32> to vector<8x1xf32>
    %152 = vector.shape_cast %125 : vector<8x1xf32> to vector<1x8x1xf32>
    tpu.vector_store %arg7[%c3_93, %c0_94, %c0_95], %152 {strides = array<i32>} : memref<4x8x1xf32, #tpu.memory_space<vmem>>, vector<1x8x1xf32>,
    %c0_i32_96 = arith.constant 0 : i32
    %153 = arith.cmpi eq, %arg2, %c0_i32_96 : i32
    %154 = arith.extui %153 : i1 to i32
    %c0_i32_97 = arith.constant 0 : i32
    %155 = arith.cmpi ne, %154, %c0_i32_97 : i32
    scf.if %155 {
      %c0_98 = arith.constant 0 : index
      %c0_99 = arith.constant 0 : index
      %c0_100 = arith.constant 0 : index
      %156 = vector.load %arg8[%c0_98, %c0_99, %c0_100] : memref<4x8x1xf32, #tpu.memory_space<vmem>>, vector<1x8x1xf32>
      %157 = vector.shape_cast %156 : vector<1x8x1xf32> to vector<8x1xf32>
      %158 = tpu.reciprocal %157 {approx = true} : vector<8x1xf32> -> vector<8x1xf32>
      %c0_101 = arith.constant 0 : index
      %c0_102 = arith.constant 0 : index
      %c0_103 = arith.constant 0 : index
      %159 = vector.load %arg9[%c0_101, %c0_102, %c0_103] : memref<4x8x8xf32, #tpu.memory_space<vmem>>, vector<1x8x8xf32>
      %160 = vector.shape_cast %159 : vector<1x8x8xf32> to vector<8x8xf32>
      %161 = vector.broadcast %158 : vector<8x1xf32> to vector<8x8xf32>
      %162 = arith.mulf %160, %161 : vector<8x8xf32>
      %c1_104 = arith.constant 1 : index
      %c0_105 = arith.constant 0 : index
      %c0_106 = arith.constant 0 : index
      %163 = vector.load %arg8[%c1_104, %c0_105, %c0_106] : memref<4x8x1xf32, #tpu.memory_space<vmem>>, vector<1x8x1xf32>
      %164 = vector.shape_cast %163 : vector<1x8x1xf32> to vector<8x1xf32>
      %165 = tpu.reciprocal %164 {approx = true} : vector<8x1xf32> -> vector<8x1xf32>
      %c1_107 = arith.constant 1 : index
      %c0_108 = arith.constant 0 : index
      %c0_109 = arith.constant 0 : index
      %166 = vector.load %arg9[%c1_107, %c0_108, %c0_109] : memref<4x8x8xf32, #tpu.memory_space<vmem>>, vector<1x8x8xf32>
      %167 = vector.shape_cast %166 : vector<1x8x8xf32> to vector<8x8xf32>
      %168 = vector.broadcast %165 : vector<8x1xf32> to vector<8x8xf32>
      %169 = arith.mulf %167, %168 : vector<8x8xf32>
      %c2_110 = arith.constant 2 : index
      %c0_111 = arith.constant 0 : index
      %c0_112 = arith.constant 0 : index
      %170 = vector.load %arg8[%c2_110, %c0_111, %c0_112] : memref<4x8x1xf32, #tpu.memory_space<vmem>>, vector<1x8x1xf32>
      %171 = vector.shape_cast %170 : vector<1x8x1xf32> to vector<8x1xf32>
      %172 = tpu.reciprocal %171 {approx = true} : vector<8x1xf32> -> vector<8x1xf32>
      %c2_113 = arith.constant 2 : index
      %c0_114 = arith.constant 0 : index
      %c0_115 = arith.constant 0 : index
      %173 = vector.load %arg9[%c2_113, %c0_114, %c0_115] : memref<4x8x8xf32, #tpu.memory_space<vmem>>, vector<1x8x8xf32>
      %174 = vector.shape_cast %173 : vector<1x8x8xf32> to vector<8x8xf32>
      %175 = vector.broadcast %172 : vector<8x1xf32> to vector<8x8xf32>
      %176 = arith.mulf %174, %175 : vector<8x8xf32>
      %c3_116 = arith.constant 3 : index
      %c0_117 = arith.constant 0 : index
      %c0_118 = arith.constant 0 : index
      %177 = vector.load %arg8[%c3_116, %c0_117, %c0_118] : memref<4x8x1xf32, #tpu.memory_space<vmem>>, vector<1x8x1xf32>
      %178 = vector.shape_cast %177 : vector<1x8x1xf32> to vector<8x1xf32>
      %179 = tpu.reciprocal %178 {approx = true} : vector<8x1xf32> -> vector<8x1xf32>
      %c3_119 = arith.constant 3 : index
      %c0_120 = arith.constant 0 : index
      %c0_121 = arith.constant 0 : index
      %180 = vector.load %arg9[%c3_119, %c0_120, %c0_121] : memref<4x8x8xf32, #tpu.memory_space<vmem>>, vector<1x8x8xf32>
      %181 = vector.shape_cast %180 : vector<1x8x8xf32> to vector<8x8xf32>
      %182 = vector.broadcast %179 : vector<8x1xf32> to vector<8x8xf32>
      %183 = arith.mulf %181, %182 : vector<8x8xf32>
      %184 = tpu.concatenate %162, %169, %176, %183 in 1 : vector<8x8xf32>, vector<8x8xf32>, vector<8x8xf32>, vector<8x8xf32> -> vector<8x32xf32>
      %185 = arith.truncf %184 : vector<8x32xf32> to vector<8x32xbf16>
      %c0_122 = arith.constant 0 : index
      %c0_123 = arith.constant 0 : index
      %c0_124 = arith.constant 0 : index
      %186 = vector.load %arg6[%c0_122, %c0_123, %c0_124] : memref<1x8x32xbf16, #tpu.memory_space<vmem>>, vector<1x8x32xbf16>
      %187 = vector.shape_cast %186 : vector<1x8x32xbf16> to vector<8x32xbf16>
      %188 = vector.shape_cast %185 : vector<8x32xbf16> to vector<1x8x32xbf16>
      tpu.vector_store %arg6[%c0_122, %c0_123, %c0_124], %188 {strides = array<i32>} : memref<1x8x32xbf16, #tpu.memory_space<vmem>>, vector<1x8x32xbf16>,
    } else {
    }
    return
  }
  func.func @transform_0(%arg0: i32, %arg1: i32, %arg2: i32) -> (i32, i32, i32, i32) {
    %c0_i32 = arith.constant 0 : i32
    %c0_i32_0 = arith.constant 0 : i32
    %c0_i32_1 = arith.constant 0 : i32
    return %c0_i32, %arg0, %arg1, %c0_i32_0 : i32, i32, i32, i32
  }
  func.func @transform_1(%arg0: i32, %arg1: i32, %arg2: i32) -> (i32, i32, i32, i32) {
    %c1_i32 = arith.constant 1 : i32
    %c0_i32 = arith.constant 0 : i32
    %c0_i32_0 = arith.constant 0 : i32
    return %c1_i32, %arg0, %arg2, %c0_i32 : i32, i32, i32, i32
  }
  func.func @transform_2(%arg0: i32, %arg1: i32, %arg2: i32) -> (i32, i32, i32, i32) {
    %c2_i32 = arith.constant 2 : i32
    %c0_i32 = arith.constant 0 : i32
    %c0_i32_0 = arith.constant 0 : i32
    return %c2_i32, %arg0, %arg2, %c0_i32 : i32, i32, i32, i32
  }
  func.func @transform_3(%arg0: i32, %arg1: i32, %arg2: i32) -> (i32, i32, i32) {
    %c0_i32 = arith.constant 0 : i32
    %c0_i32_0 = arith.constant 0 : i32
    return %arg0, %arg1, %c0_i32 : i32, i32, i32
  }
}

</mosaic_0001>

<llo_original>
// kernel: multi_head_attention.5
$region0: #{multi_head_attention.5}
  #allocation0 [shape = 'u32[]', space=smem, size = 0x4, offset = 0x4, fixed_abs, tag = 'smem constant byte address 0x4 - core index']
  #allocation1 [shape = 'u32[144,128]{1,0:T(1,128)}', space=vmem, size = 0x12000, scoped, tag = 'internal scratch']
  %s0 = inlined_call_operand.vmem [shape: bf16[16,32], index: 0, kind: input, shape index: {}]
  %s1 = inlined_call_operand.vmem [shape: bf16[32,32], index: 1, kind: input, shape index: {}]
  %s2 = inlined_call_operand.vmem [shape: f32[1,32], index: 2, kind: input, shape index: {}]
  %s3 = inlined_call_operand.hbm [shape: f32[16,32], index: 3, kind: output, shape index: {}]
  %s4 = sld [smem:[#allocation0]]
  $region22: #{multi_head_attention.5} parent=0
    _
  %s6 = ssub.s32 1, %s4
  %s7 = scalar_select 0, %s6, %s4
  $region1: #{multi_head_attention.5} parent=0
    #allocation2 [shape = 'u8[8192]{0}', space=vmem, size = 0x2000, scoped, tag = 'output window, operand 0, single buffered']
    #allocation3 [shape = 's32[1]{0}', space=sflag, size = 0x4, scoped, tag = 'scoped memory for multi_head_attention.5']
    %8 = vsyncpa [#allocation3], 0
    // Predicated region
    $region2: #{multi_head_attention.5} parent=1 // pred_check
      _
    $region3: #{multi_head_attention.5} parent=1 // pred_check_branch
      %10 = sbr.rel (0) target = $region5
    $region4: #{multi_head_attention.5} parent=1 // pred_region
      _
    $region5: #{multi_head_attention.5} parent=1 // pred_fallthru
      _
    // Predicated region
    $region6: #{multi_head_attention.5} parent=1 // pred_check
      _
    $region7: #{multi_head_attention.5} parent=1 // pred_check_branch
      %12 = sbr.rel (0) target = $region9
    $region8: #{multi_head_attention.5} parent=1 // pred_region
      _
    $region9: #{multi_head_attention.5} parent=1 // pred_fallthru
      _
    // Predicated region
    $region10: #{multi_head_attention.5} parent=1 // pred_check
      _
    $region11: #{multi_head_attention.5} parent=1 // pred_check_branch
      %14 = sbr.rel (0) target = $region13
    $region12: #{multi_head_attention.5} parent=1 // pred_region
      _
    $region13: #{multi_head_attention.5} parent=1 // pred_fallthru
      _
    %v16 = vld [vmem:[%s0] sm:$0xf]
    %v17 = vld [vmem:[%s0 + $0x4] sm:$0xf]
    %v18 = vld [vmem:[%s1] sm:$0xf]
    %v19 = vld [vmem:[%s1 + $0x4] sm:$0xf]
    %v20 = vld [vmem:[%s1 + $0x8] sm:$0xf]
    %v21 = vld [vmem:[%s1 + $0xc] sm:$0xf]
    %v22 = vld [vmem:[%s2] sm:$0x1]
    %v24 = vlaneseq
    %v25 = vshrl.u32 %v24, 7
    %v26 = vsub.s32 0, %v25
    %v27 = vrot.slane %v22, %v26
    %v31 = vunpack.c.l.b16 %v16
    %v32 = vunpack.c.l.b16 %v17
    %v33 = vpack.c.b16 %v32, %v31
    %v38 = vunpack.c.l.b16 %v18
    %v39 = vunpack.c.l.b16 %v19
    %v40 = vunpack.c.l.b16 %v20
    %v41 = vunpack.c.l.b16 %v21
    %v42 = vpack.c.b16 %v39, %v38
    %v43 = vpack.c.b16 %v41, %v40
    %vm46 = vcmask 261120
    %v48 = vsel %vm46, %v33, 0
    %50 = vmatprep.subr.bf16.mxu0 0
    %51 = vmatpush1.bf16.msra.mxu0 0
    %52 = vmatprep.subr.bf16.mxu0 0
    %53 = vmatpush1.bf16.msra.mxu0 0
    %54 = vmatprep.subr.bf16.mxu0 0
    %55 = vmatpush1.bf16.msra.mxu0 0
    %56 = vmatprep.subr.bf16.mxu0 0
    %57 = vmatpush1.bf16.msra.mxu0 0
    %58 = vmatprep.subr.bf16.mxu0 0
    %59 = vmatpush1.bf16.msra.mxu0 0
    %60 = vmatprep.subr.bf16.mxu0 0
    %61 = vmatpush1.bf16.msra.mxu0 0
    %62 = vmatprep.subr.bf16.mxu0 0
    %63 = vmatpush1.bf16.msra.mxu0 %v43
    %64 = vmatprep.subr.bf16.mxu0 0
    %65 = vmatpush1.bf16.msra.mxu0 %v42
    %66 = vmatprep.subr.bf16.mxu0 0
    %67 = vmatpush2.bf16.msra.mxu0 0
    %68 = vmatprep.subr.bf16.mxu0 0
    %69 = vmatpush2.bf16.msra.mxu0 0
    %70 = vmatprep.subr.bf16.mxu0 0
    %71 = vmatpush2.bf16.msra.mxu0 0
    %72 = vmatprep.subr.bf16.mxu0 0
    %73 = vmatpush2.bf16.msra.mxu0 0
    %74 = vmatprep.subr.bf16.mxu0 0
    %75 = vmatpush2.bf16.msra.mxu0 0
    %76 = vmatprep.subr.bf16.mxu0 0
    %77 = vmatpush2.bf16.msra.mxu0 0
    %78 = vmatprep.subr.bf16.mxu0 0
    %79 = vmatpush2.bf16.msra.mxu0 0
    %80 = vmatprep.subr.bf16.mxu0 0
    %81 = vmatpush2.bf16.msra.mxu0 0
    %82 = vmatprep.mubr.bf16.mxu0 0
    %83 = vmatmul.mubr.bf16.gmra.mxu0 %v48
    %v84 = vpop.f32.mrf.mxu0
    %v85 = vadd.f32 %v27, %v84
    %v86 = vpop.f32.mrf.mxu0
    %v87 = vpop.f32.mrf.mxu0
    %v88 = vadd.f32 %v27, %v87
    %v89 = vpop.f32.mrf.mxu0
    %90 = vdwg.mxu0
    %91 = vst.msk [vmem:[#allocation2] sm:$0xff] %vm46, %v85
    %92 = vst.msk [vmem:[#allocation2 + $0x8] sm:$0xff] %vm46, %v88
    // Predicated region
    $region14: #{multi_head_attention.5} parent=1 // pred_check
      _
    $region15: #{multi_head_attention.5} parent=1 // pred_check_branch
      %94 = sbr.rel (0) target = $region17
    $region16: #{multi_head_attention.5} parent=1 // pred_region
      %s96 = ssub.s32 256, 256
      %97 = vsyncadd [#allocation3], %s96
      %s98 = sshll.u32 [#allocation2], 4
      %s99 = int_to_ptr.vmem [resolvable:$true] %s98
      %104 = dma.vmem_to_hbm [thread:$0]  %s99, 256, %s3, [#allocation3], 128, 128, 8
    $region17: #{multi_head_attention.5} parent=1 // pred_fallthru
      _
    // Predicated region
    $region18: #{multi_head_attention.5} parent=1 // pred_check
      _
    $region19: #{multi_head_attention.5} parent=1 // pred_check_branch
      %106 = sbr.rel (0) target = $region21
    $region20: #{multi_head_attention.5} parent=1 // pred_region
      %107 = dma.done [#allocation3], 256
    $region21: #{multi_head_attention.5} parent=1 // pred_fallthru
      _
    %108 = vsyncpa [#allocation3], 1

// kernel: multi_head_attention.3
$region0: #{multi_head_attention.3}
  #allocation0 [shape = 'u32[]', space=smem, size = 0x4, offset = 0x4, fixed_abs, tag = 'smem constant byte address 0x4 - core index']
  #allocation1 [shape = 'u32[144,128]{1,0:T(1,128)}', space=vmem, size = 0x12000, scoped, tag = 'internal scratch']
  %s0 = inlined_call_operand.vmem [shape: bf16[16,32], index: 0, kind: input, shape index: {}]
  %s1 = inlined_call_operand.hbm [shape: bf16[3,32,32], index: 1, kind: input, shape index: {}]
  %s2 = inlined_call_operand.vmem [shape: f32[3,1,32], index: 2, kind: input, shape index: {}]
  %s3 = inlined_call_operand.vmem [shape: bf16[3,16,32], index: 3, kind: output, shape index: {}]
  %s4 = sld [smem:[#allocation0]]
  $region49: #{multi_head_attention.3} parent=0
    _
  %s6 = ssub.s32 1, %s4
  %s7 = scalar_select 0, %s6, %s4
  $region1: #{multi_head_attention.3} parent=0
    #allocation2 [shape = 'u8[16384]{0}', space=vmem, size = 0x4000, scoped, tag = 'input window, operand 1']
    #allocation3 [shape = 's32[2]{0}', space=sflag, size = 0x8, scoped, tag = 'scoped memory for multi_head_attention.3']
    %8 = vsyncpa [#allocation3], 0
    %s9 = scalar_lea.sflag [#allocation3], 1
    %10 = vsyncpa %s9, 0
    loop: start=0, step=1, limit=5
    $region2: #{multi_head_attention.3} parent=1 // loop_pre_header
      _
    $region3: #{multi_head_attention.3} parent=1 // loop_header
      %s12 = sphi 0, %s16
      %p13 = scmp.ge.s32.totalorder %s12, 5
      %s19 = sphi 0, %s38
      %s20 = sphi 0, %s34
      %s21 = sphi 0, %s30
      %s22 = sphi 0, %s19
      %s23 = sphi 0, %s20
      %s24 = sphi 0, %s21
      %s25 = sphi 0, %s22
      %s26 = sphi 0, %s23
      %s27 = sphi 0, %s24
      %s41 = sphi 0, %s43
      %s44 = sphi 0, %s41
      %s45 = sphi 0, %s44
      %s61 = sphi 0, %s45
      %s69 = sphi 0, %s71
      %s72 = sphi 0, %s69
      %s73 = sphi 0, %s72
      %s89 = sphi 0, %s73
      %s97 = sphi 0, %s99
      %s100 = sphi 0, %s97
      %s101 = sphi 0, %s100
      %s117 = sphi 0, %s101
      %s127 = sphi 0, %s129
      %s130 = sphi 0, %s127
      %s131 = sphi 0, %s130
      %s147 = sphi 0, %s131
    $region4: #{multi_head_attention.3} parent=1 // loop_header_branch
      %15 = sbr.rel (%p13) target = $region8
    $region5: #{multi_head_attention.3} parent=1 // loop_body
      %s17 = ssub.s32 %s12, 1
      %s18 = ssub.s32 %s12, 2
      %s28 = sadd.s32 1, %s21
      %p29 = scmp.ge.s32.totalorder %s28, 1
      %s30 = scalar_select %p29, 0, %s28
      %s31 = sadd.s32 1, %s20
      %s32 = scalar_select %p29, %s31, %s20
      %p33 = scmp.ge.s32.totalorder %s32, 3
      %s34 = scalar_select %p33, 0, %s32
      %s35 = sadd.s32 1, %s19
      %s36 = scalar_select %p33, %s35, %s19
      %p37 = scmp.ge.s32.totalorder %s36, 1
      %s38 = scalar_select %p37, 0, %s36
      %s39 = ssub.s32 %s19, %s38
      %p40 = scmp.eq.s32.totalorder %s39, 0
      %s42 = sadd.s32 %s41, 1
      %s43 = scalar_select %p40, %s41, %s42
      %p46 = pneg %p40
      %p47 = scmp.eq.s32.totalorder %s12, 2
      %p48 = por %p46, %p47
      %p49 = scmp.ne.s32.totalorder %s41, %s44
      %p50 = scmp.eq.s32.totalorder %s12, 0
      %p51 = por %p49, %p50
      %p52 = scmp.ne.s32.totalorder %s41, %s44
      %p53 = scmp.eq.s32.totalorder %s17, 2
      %p54 = por %p52, %p53
      %p55 = scmp.ne.s32.totalorder %s44, %s45
      %p56 = scmp.eq.s32.totalorder %s17, 0
      %p57 = por %p55, %p56
      %p58 = scmp.ne.s32.totalorder %s44, %s45
      %p59 = scmp.eq.s32.totalorder %s18, 2
      %p60 = por %p58, %p59
      %p62 = scmp.ne.s32.totalorder %s45, %s61
      %p63 = scmp.eq.s32.totalorder %s18, 0
      %p64 = por %p62, %p63
      %s65 = ssub.s32 %s20, %s34
      %s66 = ssub.s32 %s21, %s30
      %s67 = sor.u32 %s65, %s66
      %p68 = scmp.eq.s32.totalorder %s67, 0
      %s70 = sadd.s32 %s69, 1
      %s71 = scalar_select %p68, %s69, %s70
      %p74 = pneg %p68
      %p75 = scmp.eq.s32.totalorder %s12, 2
      %p76 = por %p74, %p75
      %p77 = scmp.ne.s32.totalorder %s69, %s72
      %p78 = scmp.eq.s32.totalorder %s12, 0
      %p79 = por %p77, %p78
      %p80 = scmp.ne.s32.totalorder %s69, %s72
      %p81 = scmp.eq.s32.totalorder %s17, 2
      %p82 = por %p80, %p81
      %p83 = scmp.ne.s32.totalorder %s72, %s73
      %p84 = scmp.eq.s32.totalorder %s17, 0
      %p85 = por %p83, %p84
      %p86 = scmp.ne.s32.totalorder %s72, %s73
      %p87 = scmp.eq.s32.totalorder %s18, 2
      %p88 = por %p86, %p87
      %p90 = scmp.ne.s32.totalorder %s73, %s89
      %p91 = scmp.eq.s32.totalorder %s18, 0
      %p92 = por %p90, %p91
      %s93 = ssub.s32 %s20, %s34
      %s94 = ssub.s32 %s21, %s30
      %s95 = sor.u32 %s93, %s94
      %p96 = scmp.eq.s32.totalorder %s95, 0
      %s98 = sadd.s32 %s97, 1
      %s99 = scalar_select %p96, %s97, %s98
      %p102 = pneg %p96
      %p103 = scmp.eq.s32.totalorder %s12, 2
      %p104 = por %p102, %p103
      %p105 = scmp.ne.s32.totalorder %s97, %s100
      %p106 = scmp.eq.s32.totalorder %s12, 0
      %p107 = por %p105, %p106
      %p108 = scmp.ne.s32.totalorder %s97, %s100
      %p109 = scmp.eq.s32.totalorder %s17, 2
      %p110 = por %p108, %p109
      %p111 = scmp.ne.s32.totalorder %s100, %s101
      %p112 = scmp.eq.s32.totalorder %s17, 0
      %p113 = por %p111, %p112
      %p114 = scmp.ne.s32.totalorder %s100, %s101
      %p115 = scmp.eq.s32.totalorder %s18, 2
      %p116 = por %p114, %p115
      %p118 = scmp.ne.s32.totalorder %s101, %s117
      %p119 = scmp.eq.s32.totalorder %s18, 0
      %p120 = por %p118, %p119
      %s121 = ssub.s32 %s20, %s34
      %s122 = ssub.s32 %s19, %s38
      %s123 = sor.u32 %s121, %s122
      %s124 = ssub.s32 %s21, %s30
      %s125 = sor.u32 %s123, %s124
      %p126 = scmp.eq.s32.totalorder %s125, 0
      %s128 = sadd.s32 %s127, 1
      %s129 = scalar_select %p126, %s127, %s128
      %p132 = pneg %p126
      %p133 = scmp.eq.s32.totalorder %s12, 2
      %p134 = por %p132, %p133
      %p135 = scmp.ne.s32.totalorder %s127, %s130
      %p136 = scmp.eq.s32.totalorder %s12, 0
      %p137 = por %p135, %p136
      %p138 = scmp.ne.s32.totalorder %s127, %s130
      %p139 = scmp.eq.s32.totalorder %s17, 2
      %p140 = por %p138, %p139
      %p141 = scmp.ne.s32.totalorder %s130, %s131
      %p142 = scmp.eq.s32.totalorder %s17, 0
      %p143 = por %p141, %p142
      %p144 = scmp.ne.s32.totalorder %s130, %s131
      %p145 = scmp.eq.s32.totalorder %s18, 2
      %p146 = por %p144, %p145
      %p148 = scmp.ne.s32.totalorder %s131, %s147
      %p149 = scmp.eq.s32.totalorder %s18, 0
      %p150 = por %p148, %p149
      %p151 = scmp.le.s32.totalorder 1, %s12
      %p152 = scmp.lt.s32.totalorder %s12, 4
      %p153 = pnand %p151, %p152
      %p154 = pneg %p153
      // Predicated region
      $region9: #{multi_head_attention.3} parent=5 // pred_check
        _
      $region10: #{multi_head_attention.3} parent=5 // pred_check_branch
        %156 = sbr.rel (%p153) target = $region12
      $region11: #{multi_head_attention.3} parent=5 // pred_region
        %s157 = ssub.s32 %s12, 1
        // Predicated region
        $region13: #{multi_head_attention.3} parent=11 // pred_check
          %p158 = pneg %p57
        $region14: #{multi_head_attention.3} parent=11 // pred_check_branch
          %160 = sbr.rel (%p158) target = $region16
        $region15: #{multi_head_attention.3} parent=11 // pred_region
          %s161 = smul.u32 2, %s22
          %p162 = scmp.lt.s32.totalorder %s161, 1
          %s163 = scalar_select %p162, %s161, 1
          %s164 = smul.addr %s163, 4
          %s165 = scalar_lea.vmem %s0, %s164
          %s166 = smul.u32 2, %s22
        $region16: #{multi_head_attention.3} parent=11 // pred_fallthru
          _
      $region12: #{multi_head_attention.3} parent=5 // pred_fallthru
        _
      %p167 = scmp.lt.s32.totalorder %s12, 3
      // Predicated region
      $region17: #{multi_head_attention.3} parent=5 // pred_check
        %p168 = pneg %p167
      $region18: #{multi_head_attention.3} parent=5 // pred_check_branch
        %170 = sbr.rel (%p168) target = $region20
      $region19: #{multi_head_attention.3} parent=5 // pred_region
        // Predicated region
        $region21: #{multi_head_attention.3} parent=19 // pred_check
          %p171 = pneg %p79
        $region22: #{multi_head_attention.3} parent=19 // pred_check_branch
          %173 = sbr.rel (%p171) target = $region24
        $region23: #{multi_head_attention.3} parent=19 // pred_region
          %s174 = sand.u32 %s69, 1
          %s175 = scalar_lea.sflag [#allocation3], %s174
          %s176 = sand.u32 %s69, 1
          %s177 = smul.addr %s176, 16
          %s178 = scalar_lea.vmem [#allocation2], %s177
          %s180 = ssub.s32 256, 256
          %181 = vsyncadd %s175, %s180
          %s182 = smul.addr %s20, 4
          %s183 = sadd.s32 %s21, %s182
          %s184 = smul.addr %s183, 64
          %s185 = scalar_lea.hbm %s1, %s184
          %s186 = sshll.u32 %s178, 4
          %s187 = int_to_ptr.vmem [resolvable:$true] %s186
          %192 = dma.hbm_to_vmem [thread:$0]  %s185, 256, %s187, %s175, 64, 64, 4
        $region24: #{multi_head_attention.3} parent=19 // pred_fallthru
          _
        // Predicated region
        $region25: #{multi_head_attention.3} parent=19 // pred_check
          %p193 = pneg %p107
        $region26: #{multi_head_attention.3} parent=19 // pred_check_branch
          %195 = sbr.rel (%p193) target = $region28
        $region27: #{multi_head_attention.3} parent=19 // pred_region
          %p196 = scmp.lt.s32.totalorder %s20, 2
          %s197 = scalar_select %p196, %s20, 2
          %p198 = scmp.lt.s32.totalorder %s21, 0
          %s199 = scalar_select %p198, %s21, 0
          %s200 = sadd.s32 %s199, %s197
          %s201 = scalar_lea.vmem %s2, %s200
        $region28: #{multi_head_attention.3} parent=19 // pred_fallthru
          _
      $region20: #{multi_head_attention.3} parent=5 // pred_fallthru
        _
      %p202 = scmp.le.s32.totalorder 1, %s12
      %p203 = scmp.lt.s32.totalorder %s12, 4
      %p204 = pnand %p202, %p203
      %p205 = pneg %p204
      // Predicated region
      $region29: #{multi_head_attention.3} parent=5 // pred_check
        _
      $region30: #{multi_head_attention.3} parent=5 // pred_check_branch
        %207 = sbr.rel (%p204) target = $region32
      $region31: #{multi_head_attention.3} parent=5 // pred_region
        %s208 = ssub.s32 %s12, 1
        %s209 = sand.u32 %s72, 1
        %s210 = scalar_lea.sflag [#allocation3], %s209
        %s211 = sand.u32 %s72, 1
        %s212 = smul.addr %s211, 16
        %s213 = scalar_lea.vmem [#allocation2], %s212
        // Predicated region
        $region33: #{multi_head_attention.3} parent=31 // pred_check
          %p214 = pneg %p85
        $region34: #{multi_head_attention.3} parent=31 // pred_check_branch
          %216 = sbr.rel (%p214) target = $region36
        $region35: #{multi_head_attention.3} parent=31 // pred_region
          %217 = dma.done %s210, 256
        $region36: #{multi_head_attention.3} parent=31 // pred_fallthru
          _
        %s218 = smul.u32 2, %s22
        %p219 = scmp.lt.s32.totalorder %s218, 1
        %s220 = scalar_select %p219, %s218, 1
        %s221 = smul.addr %s220, 4
        %s222 = scalar_lea.vmem %s0, %s221
        %p223 = pneg %p57
        %p224 = pneg %p54
        %s225 = sand.u32 %s72, 1
        %s226 = scalar_lea.sflag [#allocation3], %s225
        %s227 = sand.u32 %s72, 1
        %s228 = smul.addr %s227, 16
        %s229 = scalar_lea.vmem [#allocation2], %s228
        %p230 = pneg %p85
        %p231 = pneg %p82
        %p232 = scmp.lt.s32.totalorder %s23, 2
        %s233 = scalar_select %p232, %s23, 2
        %p234 = scmp.lt.s32.totalorder %s24, 0
        %s235 = scalar_select %p234, %s24, 0
        %s236 = sadd.s32 %s235, %s233
        %s237 = scalar_lea.vmem %s2, %s236
        %p238 = pneg %p113
        %p239 = pneg %p110
        %p240 = pneg %p143
        %p241 = pneg %p140
        %s242 = smul.u32 2, %s22
        %p243 = scmp.lt.s32.totalorder %s23, 2
        %s244 = scalar_select %p243, %s23, 2
        %p245 = scmp.lt.s32.totalorder %s242, 1
        %s246 = scalar_select %p245, %s242, 1
        %p247 = scmp.lt.s32.totalorder %s24, 0
        %s248 = scalar_select %p247, %s24, 0
        %s249 = sadd.s32 %s248, %s246
        %s250 = smul.addr %s244, 2
        %s251 = sadd.s32 %s249, %s250
        %s252 = smul.addr %s251, 4
        %s253 = scalar_lea.vmem %s3, %s252
        %s254 = smul.u32 2, %s22
        %p255 = scmp.lt.s32.totalorder %s254, 1
        %s256 = scalar_select %p255, %s254, 1
        %s257 = smul.addr %s256, 4
        %s258 = scalar_lea.vmem %s0, %s257
        %s259 = smul.u32 2, %s22
        %p260 = scmp.lt.s32.totalorder %s23, 2
        %s261 = scalar_select %p260, %s23, 2
        %p262 = scmp.lt.s32.totalorder %s24, 0
        %s263 = scalar_select %p262, %s24, 0
        %s264 = sadd.s32 %s263, %s261
        %s265 = scalar_lea.vmem %s2, %s264
        %s266 = smul.u32 2, %s22
        %p267 = scmp.lt.s32.totalorder %s23, 2
        %s268 = scalar_select %p267, %s23, 2
        %p269 = scmp.lt.s32.totalorder %s266, 1
        %s270 = scalar_select %p269, %s266, 1
        %p271 = scmp.lt.s32.totalorder %s24, 0
        %s272 = scalar_select %p271, %s24, 0
        %s273 = sadd.s32 %s272, %s270
        %s274 = smul.addr %s268, 2
        %s275 = sadd.s32 %s273, %s274
        %s276 = smul.addr %s275, 4
        %s277 = scalar_lea.vmem %s3, %s276
        %s278 = smul.u32 2, %s22
        %v280 = vld [vmem:[%s258] sm:$0xf]
        %v281 = vld [vmem:[%s258 + $0x4] sm:$0xf]
        %v282 = vld [vmem:[%s213] sm:$0xf]
        %v283 = vld [vmem:[%s213 + $0x4] sm:$0xf]
        %v284 = vld [vmem:[%s213 + $0x8] sm:$0xf]
        %v285 = vld [vmem:[%s213 + $0xc] sm:$0xf]
        %v286 = vld [vmem:[%s265] sm:$0x1]
        %v288 = vlaneseq
        %v289 = vshrl.u32 %v288, 7
        %v290 = vsub.s32 0, %v289
        %v291 = vrot.slane %v286, %v290
        %v295 = vunpack.c.l.b16 %v280
        %v296 = vunpack.c.l.b16 %v281
        %v297 = vpack.c.b16 %v296, %v295
        %v302 = vunpack.c.l.b16 %v282
        %v303 = vunpack.c.l.b16 %v283
        %v304 = vunpack.c.l.b16 %v284
        %v305 = vunpack.c.l.b16 %v285
        %v306 = vpack.c.b16 %v303, %v302
        %v307 = vpack.c.b16 %v305, %v304
        %vm310 = vcmask 261120
        %v312 = vsel %vm310, %v297, 0
        %314 = vmatprep.subr.bf16.mxu0 0
        %315 = vmatpush1.bf16.msra.mxu0 0
        %316 = vmatprep.subr.bf16.mxu0 0
        %317 = vmatpush1.bf16.msra.mxu0 0
        %318 = vmatprep.subr.bf16.mxu0 0
        %319 = vmatpush1.bf16.msra.mxu0 0
        %320 = vmatprep.subr.bf16.mxu0 0
        %321 = vmatpush1.bf16.msra.mxu0 0
        %322 = vmatprep.subr.bf16.mxu0 0
        %323 = vmatpush1.bf16.msra.mxu0 0
        %324 = vmatprep.subr.bf16.mxu0 0
        %325 = vmatpush1.bf16.msra.mxu0 0
        %326 = vmatprep.subr.bf16.mxu0 0
        %327 = vmatpush1.bf16.msra.mxu0 %v307
        %328 = vmatprep.subr.bf16.mxu0 0
        %329 = vmatpush1.bf16.msra.mxu0 %v306
        %330 = vmatprep.subr.bf16.mxu0 0
        %331 = vmatpush2.bf16.msra.mxu0 0
        %332 = vmatprep.subr.bf16.mxu0 0
        %333 = vmatpush2.bf16.msra.mxu0 0
        %334 = vmatprep.subr.bf16.mxu0 0
        %335 = vmatpush2.bf16.msra.mxu0 0
        %336 = vmatprep.subr.bf16.mxu0 0
        %337 = vmatpush2.bf16.msra.mxu0 0
        %338 = vmatprep.subr.bf16.mxu0 0
        %339 = vmatpush2.bf16.msra.mxu0 0
        %340 = vmatprep.subr.bf16.mxu0 0
        %341 = vmatpush2.bf16.msra.mxu0 0
        %342 = vmatprep.subr.bf16.mxu0 0
        %343 = vmatpush2.bf16.msra.mxu0 0
        %344 = vmatprep.subr.bf16.mxu0 0
        %345 = vmatpush2.bf16.msra.mxu0 0
        %346 = vmatprep.mubr.bf16.mxu0 0
        %347 = vmatmul.mubr.bf16.gmra.mxu0 %v312
        %v348 = vpop.f32.mrf.mxu0
        %v349 = vadd.f32 %v291, %v348
        %v350 = vpop.f32.mrf.mxu0
        %v351 = vpop.f32.mrf.mxu0
        %v352 = vadd.f32 %v291, %v351
        %v353 = vpop.f32.mrf.mxu0
        %354 = vdwg.mxu0
        %v355 = vpack.c.bf16 %v352, %v349
        %v357 = vunpack.c.l.b16 %v355
        %v358 = vunpack.c.h.b16 %v355
        %v359 = vpack.c.b16 %v357, %v357
        %v360 = vpack.c.b16 %v358, %v358
        %vm363 = vcmask 257024
        %364 = vst.msk [vmem:[%s277] sm:$0xf] %vm363, %v359
        %365 = vst.msk [vmem:[%s277 + $0x4] sm:$0xf] %vm363, %v360
        %s366 = smul.u32 2, %s22
        %p367 = scmp.lt.s32.totalorder %s23, 2
        %s368 = scalar_select %p367, %s23, 2
        %p369 = scmp.lt.s32.totalorder %s366, 1
        %s370 = scalar_select %p369, %s366, 1
        %p371 = scmp.lt.s32.totalorder %s24, 0
        %s372 = scalar_select %p371, %s24, 0
        %s373 = sadd.s32 %s372, %s370
        %s374 = smul.addr %s368, 2
        %s375 = sadd.s32 %s373, %s374
        %s376 = smul.addr %s375, 4
        %s377 = scalar_lea.vmem %s3, %s376
        // Predicated region
        $region37: #{multi_head_attention.3} parent=31 // pred_check
          %p378 = pneg %p140
        $region38: #{multi_head_attention.3} parent=31 // pred_check_branch
          %380 = sbr.rel (%p378) target = $region40
        $region39: #{multi_head_attention.3} parent=31 // pred_region
          %s381 = smul.u32 2, %s22
        $region40: #{multi_head_attention.3} parent=31 // pred_fallthru
          _
      $region32: #{multi_head_attention.3} parent=5 // pred_fallthru
        _
      %p382 = scmp.le.s32.totalorder 2, %s12
      // Predicated region
      $region41: #{multi_head_attention.3} parent=5 // pred_check
        %p383 = pneg %p382
      $region42: #{multi_head_attention.3} parent=5 // pred_check_branch
        %385 = sbr.rel (%p383) target = $region44
      $region43: #{multi_head_attention.3} parent=5 // pred_region
        %s386 = ssub.s32 %s12, 2
        // Predicated region
        $region45: #{multi_head_attention.3} parent=43 // pred_check
          %p387 = pneg %p146
        $region46: #{multi_head_attention.3} parent=43 // pred_check_branch
          %389 = sbr.rel (%p387) target = $region48
        $region47: #{multi_head_attention.3} parent=43 // pred_region
          %s390 = smul.u32 2, %s25
          %p391 = scmp.lt.s32.totalorder %s26, 2
          %s392 = scalar_select %p391, %s26, 2
          %p393 = scmp.lt.s32.totalorder %s390, 1
          %s394 = scalar_select %p393, %s390, 1
          %p395 = scmp.lt.s32.totalorder %s27, 0
          %s396 = scalar_select %p395, %s27, 0
          %s397 = sadd.s32 %s396, %s394
          %s398 = smul.addr %s392, 2
          %s399 = sadd.s32 %s397, %s398
          %s400 = smul.addr %s399, 4
          %s401 = scalar_lea.vmem %s3, %s400
        $region48: #{multi_head_attention.3} parent=43 // pred_fallthru
          _
      $region44: #{multi_head_attention.3} parent=5 // pred_fallthru
        _
    $region6: #{multi_head_attention.3} parent=1 // loop_footer
      %s16 = sadd.s32 1, %s12
    $region7: #{multi_head_attention.3} parent=1 // loop_footer_branch
      %11 = sbr.rel target = $region3
    $region8: #{multi_head_attention.3} parent=1 // loop_exit
      _
    %402 = vsyncpa [#allocation3], 1
    %s403 = scalar_lea.sflag [#allocation3], 1
    %404 = vsyncpa %s403, 1

// kernel: multi_head_attention.4
$region0: #{multi_head_attention.4}
  #allocation0 [shape = 'u32[]', space=smem, size = 0x4, offset = 0x4, fixed_abs, tag = 'smem constant byte address 0x4 - core index']
  #allocation1 [shape = 'u32[144,128]{1,0:T(1,128)}', space=vmem, size = 0x12000, scoped, tag = 'internal scratch']
  #allocation2 [shape = 'f32[4,8,1]{2,1,0:T(8,128)}', space=vmem, size = 0x4000, scoped, tag = 'scratch operand']
  #allocation3 [shape = 'f32[4,8,1]{2,1,0:T(8,128)}', space=vmem, size = 0x4000, scoped, tag = 'scratch operand']
  #allocation4 [shape = 'f32[4,8,8]{2,1,0:T(8,128)}', space=vmem, size = 0x4000, scoped, tag = 'scratch operand']
  %s0 = inlined_call_operand.vmem [shape: bf16[3,2,8,32], index: 0, kind: input, shape index: {}, may-alias: {0,1,2}]
  %s1 = inlined_call_operand.vmem [shape: bf16[3,2,8,32], index: 1, kind: input, shape index: {}, may-alias: {0,1,2}]
  %s2 = inlined_call_operand.vmem [shape: bf16[3,2,8,32], index: 2, kind: input, shape index: {}, may-alias: {0,1,2}]
  %s3 = inlined_call_operand.vmem [shape: bf16[2,8,32], index: 3, kind: output, shape index: {}]
  %s4 = sld [smem:[#allocation0]]
  $region53: #{multi_head_attention.4} parent=0
    _
  %s6 = ssub.s32 1, %s4
  %s7 = scalar_select 0, %s6, %s4
  loop: start=0, step=1, limit=4
  $region2: #{multi_head_attention.4} parent=0 // loop_pre_header
    _
  $region3: #{multi_head_attention.4} parent=0 // loop_header
    %s9 = sphi 0, %s13
    %p10 = scmp.ge.s32.totalorder %s9, 4
    %s16 = sphi 0, %s35
    %s17 = sphi 0, %s31
    %s18 = sphi 0, %s27
    %s19 = sphi 0, %s16
    %s20 = sphi 0, %s17
    %s21 = sphi 0, %s18
    %s22 = sphi 0, %s19
    %s23 = sphi 0, %s20
    %s24 = sphi 0, %s21
    %s40 = sphi 0, %s42
    %s43 = sphi 0, %s40
    %s44 = sphi 0, %s43
    %s60 = sphi 0, %s44
    %s68 = sphi 0, %s70
    %s71 = sphi 0, %s68
    %s72 = sphi 0, %s71
    %s88 = sphi 0, %s72
    %s96 = sphi 0, %s98
    %s99 = sphi 0, %s96
    %s100 = sphi 0, %s99
    %s116 = sphi 0, %s100
    %s124 = sphi 0, %s126
    %s127 = sphi 0, %s124
    %s128 = sphi 0, %s127
    %s144 = sphi 0, %s128
  $region4: #{multi_head_attention.4} parent=0 // loop_header_branch
    %12 = sbr.rel (%p10) target = $region8
  $region5: #{multi_head_attention.4} parent=0 // loop_body
    %s14 = ssub.s32 %s9, 1
    %s15 = ssub.s32 %s9, 2
    %s25 = sadd.s32 1, %s18
    %p26 = scmp.ge.s32.totalorder %s25, 1
    %s27 = scalar_select %p26, 0, %s25
    %s28 = sadd.s32 1, %s17
    %s29 = scalar_select %p26, %s28, %s17
    %p30 = scmp.ge.s32.totalorder %s29, 1
    %s31 = scalar_select %p30, 0, %s29
    %s32 = sadd.s32 1, %s16
    %s33 = scalar_select %p30, %s32, %s16
    %p34 = scmp.ge.s32.totalorder %s33, 2
    %s35 = scalar_select %p34, 0, %s33
    %s36 = ssub.s32 %s16, %s35
    %s37 = ssub.s32 %s17, %s31
    %s38 = sor.u32 %s36, %s37
    %p39 = scmp.eq.s32.totalorder %s38, 0
    %s41 = sadd.s32 %s40, 1
    %s42 = scalar_select %p39, %s40, %s41
    %p45 = pneg %p39
    %p46 = scmp.eq.s32.totalorder %s9, 1
    %p47 = por %p45, %p46
    %p48 = scmp.ne.s32.totalorder %s40, %s43
    %p49 = scmp.eq.s32.totalorder %s9, 0
    %p50 = por %p48, %p49
    %p51 = scmp.ne.s32.totalorder %s40, %s43
    %p52 = scmp.eq.s32.totalorder %s14, 1
    %p53 = por %p51, %p52
    %p54 = scmp.ne.s32.totalorder %s43, %s44
    %p55 = scmp.eq.s32.totalorder %s14, 0
    %p56 = por %p54, %p55
    %p57 = scmp.ne.s32.totalorder %s43, %s44
    %p58 = scmp.eq.s32.totalorder %s15, 1
    %p59 = por %p57, %p58
    %p61 = scmp.ne.s32.totalorder %s44, %s60
    %p62 = scmp.eq.s32.totalorder %s15, 0
    %p63 = por %p61, %p62
    %s64 = ssub.s32 %s16, %s35
    %s65 = ssub.s32 %s18, %s27
    %s66 = sor.u32 %s64, %s65
    %p67 = scmp.eq.s32.totalorder %s66, 0
    %s69 = sadd.s32 %s68, 1
    %s70 = scalar_select %p67, %s68, %s69
    %p73 = pneg %p67
    %p74 = scmp.eq.s32.totalorder %s9, 1
    %p75 = por %p73, %p74
    %p76 = scmp.ne.s32.totalorder %s68, %s71
    %p77 = scmp.eq.s32.totalorder %s9, 0
    %p78 = por %p76, %p77
    %p79 = scmp.ne.s32.totalorder %s68, %s71
    %p80 = scmp.eq.s32.totalorder %s14, 1
    %p81 = por %p79, %p80
    %p82 = scmp.ne.s32.totalorder %s71, %s72
    %p83 = scmp.eq.s32.totalorder %s14, 0
    %p84 = por %p82, %p83
    %p85 = scmp.ne.s32.totalorder %s71, %s72
    %p86 = scmp.eq.s32.totalorder %s15, 1
    %p87 = por %p85, %p86
    %p89 = scmp.ne.s32.totalorder %s72, %s88
    %p90 = scmp.eq.s32.totalorder %s15, 0
    %p91 = por %p89, %p90
    %s92 = ssub.s32 %s16, %s35
    %s93 = ssub.s32 %s18, %s27
    %s94 = sor.u32 %s92, %s93
    %p95 = scmp.eq.s32.totalorder %s94, 0
    %s97 = sadd.s32 %s96, 1
    %s98 = scalar_select %p95, %s96, %s97
    %p101 = pneg %p95
    %p102 = scmp.eq.s32.totalorder %s9, 1
    %p103 = por %p101, %p102
    %p104 = scmp.ne.s32.totalorder %s96, %s99
    %p105 = scmp.eq.s32.totalorder %s9, 0
    %p106 = por %p104, %p105
    %p107 = scmp.ne.s32.totalorder %s96, %s99
    %p108 = scmp.eq.s32.totalorder %s14, 1
    %p109 = por %p107, %p108
    %p110 = scmp.ne.s32.totalorder %s99, %s100
    %p111 = scmp.eq.s32.totalorder %s14, 0
    %p112 = por %p110, %p111
    %p113 = scmp.ne.s32.totalorder %s99, %s100
    %p114 = scmp.eq.s32.totalorder %s15, 1
    %p115 = por %p113, %p114
    %p117 = scmp.ne.s32.totalorder %s100, %s116
    %p118 = scmp.eq.s32.totalorder %s15, 0
    %p119 = por %p117, %p118
    %s120 = ssub.s32 %s16, %s35
    %s121 = ssub.s32 %s17, %s31
    %s122 = sor.u32 %s120, %s121
    %p123 = scmp.eq.s32.totalorder %s122, 0
    %s125 = sadd.s32 %s124, 1
    %s126 = scalar_select %p123, %s124, %s125
    %p129 = pneg %p123
    %p130 = scmp.eq.s32.totalorder %s9, 1
    %p131 = por %p129, %p130
    %p132 = scmp.ne.s32.totalorder %s124, %s127
    %p133 = scmp.eq.s32.totalorder %s9, 0
    %p134 = por %p132, %p133
    %p135 = scmp.ne.s32.totalorder %s124, %s127
    %p136 = scmp.eq.s32.totalorder %s14, 1
    %p137 = por %p135, %p136
    %p138 = scmp.ne.s32.totalorder %s127, %s128
    %p139 = scmp.eq.s32.totalorder %s14, 0
    %p140 = por %p138, %p139
    %p141 = scmp.ne.s32.totalorder %s127, %s128
    %p142 = scmp.eq.s32.totalorder %s15, 1
    %p143 = por %p141, %p142
    %p145 = scmp.ne.s32.totalorder %s128, %s144
    %p146 = scmp.eq.s32.totalorder %s15, 0
    %p147 = por %p145, %p146
    %p148 = scmp.le.s32.totalorder 1, %s9
    %p149 = scmp.lt.s32.totalorder %s9, 3
    %p150 = pnand %p148, %p149
    %p151 = pneg %p150
    // Predicated region
    $region9: #{multi_head_attention.4} parent=5 // pred_check
      _
    $region10: #{multi_head_attention.4} parent=5 // pred_check_branch
      %153 = sbr.rel (%p150) target = $region12
    $region11: #{multi_head_attention.4} parent=5 // pred_region
      %s154 = ssub.s32 %s9, 1
    $region12: #{multi_head_attention.4} parent=5 // pred_fallthru
      _
    %p155 = scmp.lt.s32.totalorder %s9, 2
    // Predicated region
    $region13: #{multi_head_attention.4} parent=5 // pred_check
      %p156 = pneg %p155
    $region14: #{multi_head_attention.4} parent=5 // pred_check_branch
      %158 = sbr.rel (%p156) target = $region16
    $region15: #{multi_head_attention.4} parent=5 // pred_region
      // Predicated region
      $region17: #{multi_head_attention.4} parent=15 // pred_check
        %p159 = pneg %p50
      $region18: #{multi_head_attention.4} parent=15 // pred_check_branch
        %161 = sbr.rel (%p159) target = $region20
      $region19: #{multi_head_attention.4} parent=15 // pred_region
        %p162 = scmp.lt.s32.totalorder %s16, 1
        %s163 = scalar_select %p162, %s16, 1
        %p164 = scmp.lt.s32.totalorder %s17, 0
        %s165 = scalar_select %p164, %s17, 0
        %s166 = sadd.s32 %s165, %s163
        %s167 = smul.addr %s166, 4
        %s168 = scalar_lea.vmem %s0, %s167
      $region20: #{multi_head_attention.4} parent=15 // pred_fallthru
        _
      // Predicated region
      $region21: #{multi_head_attention.4} parent=15 // pred_check
        %p169 = pneg %p78
      $region22: #{multi_head_attention.4} parent=15 // pred_check_branch
        %171 = sbr.rel (%p169) target = $region24
      $region23: #{multi_head_attention.4} parent=15 // pred_region
        %p172 = scmp.lt.s32.totalorder %s16, 1
        %s173 = scalar_select %p172, %s16, 1
        %p174 = scmp.lt.s32.totalorder %s18, 0
        %s175 = scalar_select %p174, %s18, 0
        %s176 = sadd.s32 %s175, %s173
        %s177 = sadd.s32 %s176, 2
        %s178 = smul.addr %s177, 4
        %s179 = scalar_lea.vmem %s1, %s178
      $region24: #{multi_head_attention.4} parent=15 // pred_fallthru
        _
      // Predicated region
      $region25: #{multi_head_attention.4} parent=15 // pred_check
        %p180 = pneg %p106
      $region26: #{multi_head_attention.4} parent=15 // pred_check_branch
        %182 = sbr.rel (%p180) target = $region28
      $region27: #{multi_head_attention.4} parent=15 // pred_region
        %p183 = scmp.lt.s32.totalorder %s16, 1
        %s184 = scalar_select %p183, %s16, 1
        %p185 = scmp.lt.s32.totalorder %s18, 0
        %s186 = scalar_select %p185, %s18, 0
        %s187 = sadd.s32 %s186, %s184
        %s188 = sadd.s32 %s187, 4
        %s189 = smul.addr %s188, 4
        %s190 = scalar_lea.vmem %s2, %s189
      $region28: #{multi_head_attention.4} parent=15 // pred_fallthru
        _
    $region16: #{multi_head_attention.4} parent=5 // pred_fallthru
      _
    %p191 = scmp.le.s32.totalorder 1, %s9
    %p192 = scmp.lt.s32.totalorder %s9, 3
    %p193 = pnand %p191, %p192
    %p194 = pneg %p193
    // Predicated region
    $region29: #{multi_head_attention.4} parent=5 // pred_check
      _
    $region30: #{multi_head_attention.4} parent=5 // pred_check_branch
      %196 = sbr.rel (%p193) target = $region32
    $region31: #{multi_head_attention.4} parent=5 // pred_region
      %s197 = ssub.s32 %s9, 1
      %p198 = scmp.lt.s32.totalorder %s19, 1
      %s199 = scalar_select %p198, %s19, 1
      %p200 = scmp.lt.s32.totalorder %s20, 0
      %s201 = scalar_select %p200, %s20, 0
      %s202 = sadd.s32 %s201, %s199
      %s203 = smul.addr %s202, 4
      %s204 = scalar_lea.vmem %s0, %s203
      %p205 = pneg %p56
      %p206 = pneg %p53
      %p207 = scmp.lt.s32.totalorder %s19, 1
      %s208 = scalar_select %p207, %s19, 1
      %p209 = scmp.lt.s32.totalorder %s21, 0
      %s210 = scalar_select %p209, %s21, 0
      %s211 = sadd.s32 %s210, %s208
      %s212 = sadd.s32 %s211, 2
      %s213 = smul.addr %s212, 4
      %s214 = scalar_lea.vmem %s1, %s213
      %p215 = pneg %p84
      %p216 = pneg %p81
      %p217 = scmp.lt.s32.totalorder %s19, 1
      %s218 = scalar_select %p217, %s19, 1
      %p219 = scmp.lt.s32.totalorder %s21, 0
      %s220 = scalar_select %p219, %s21, 0
      %s221 = sadd.s32 %s220, %s218
      %s222 = sadd.s32 %s221, 4
      %s223 = smul.addr %s222, 4
      %s224 = scalar_lea.vmem %s2, %s223
      %p225 = pneg %p112
      %p226 = pneg %p109
      %p227 = pneg %p140
      %p228 = pneg %p137
      %p229 = scmp.lt.s32.totalorder %s19, 1
      %s230 = scalar_select %p229, %s19, 1
      %p231 = scmp.lt.s32.totalorder %s20, 0
      %s232 = scalar_select %p231, %s20, 0
      %s233 = sadd.s32 %s232, %s230
      %s234 = smul.addr %s233, 4
      %s235 = scalar_lea.vmem %s3, %s234
      %p236 = scmp.lt.s32.totalorder %s19, 1
      %s237 = scalar_select %p236, %s19, 1
      %p238 = scmp.lt.s32.totalorder %s20, 0
      %s239 = scalar_select %p238, %s20, 0
      %s240 = sadd.s32 %s239, %s237
      %s241 = smul.addr %s240, 4
      %s242 = scalar_lea.vmem %s0, %s241
      %p243 = scmp.lt.s32.totalorder %s19, 1
      %s244 = scalar_select %p243, %s19, 1
      %p245 = scmp.lt.s32.totalorder %s21, 0
      %s246 = scalar_select %p245, %s21, 0
      %s247 = sadd.s32 %s246, %s244
      %s248 = sadd.s32 %s247, 2
      %s249 = smul.addr %s248, 4
      %s250 = scalar_lea.vmem %s1, %s249
      %p251 = scmp.lt.s32.totalorder %s19, 1
      %s252 = scalar_select %p251, %s19, 1
      %p253 = scmp.lt.s32.totalorder %s21, 0
      %s254 = scalar_select %p253, %s21, 0
      %s255 = sadd.s32 %s254, %s252
      %s256 = sadd.s32 %s255, 4
      %s257 = smul.addr %s256, 4
      %s258 = scalar_lea.vmem %s2, %s257
      %p259 = scmp.lt.s32.totalorder %s19, 1
      %s260 = scalar_select %p259, %s19, 1
      %p261 = scmp.lt.s32.totalorder %s20, 0
      %s262 = scalar_select %p261, %s20, 0
      %s263 = sadd.s32 %s262, %s260
      %s264 = smul.addr %s263, 4
      %s265 = scalar_lea.vmem %s3, %s264
      %p267 = scmp.eq.s32.totalorder %s21, 0
      // Predicated region
      $region33: #{multi_head_attention.4} parent=31 // pred_check
        %p268 = pneg %p267
      $region34: #{multi_head_attention.4} parent=31 // pred_check_branch
        %270 = sbr.rel (%p268) target = $region36
      $region35: #{multi_head_attention.4} parent=31 // pred_region
        %vm271 = vcmask 7168
        %272 = vst.msk [vmem:[#allocation2] sm:$0xff] %vm271, -inf
        %273 = vst.msk [vmem:[#allocation2 + $0x8] sm:$0xff] %vm271, -inf
        %274 = vst.msk [vmem:[#allocation2 + $0x10] sm:$0xff] %vm271, -inf
        %275 = vst.msk [vmem:[#allocation2 + $0x18] sm:$0xff] %vm271, -inf
        %276 = vst.msk [vmem:[#allocation3] sm:$0xff] %vm271, 0.0
        %277 = vst.msk [vmem:[#allocation3 + $0x8] sm:$0xff] %vm271, 0.0
        %278 = vst.msk [vmem:[#allocation3 + $0x10] sm:$0xff] %vm271, 0.0
        %279 = vst.msk [vmem:[#allocation3 + $0x18] sm:$0xff] %vm271, 0.0
        %vm280 = vcmask 64512
        %281 = vst.msk [vmem:[#allocation4] sm:$0xff] %vm280, 0.0
        %282 = vst.msk [vmem:[#allocation4 + $0x8] sm:$0xff] %vm280, 0.0
        %283 = vst.msk [vmem:[#allocation4 + $0x10] sm:$0xff] %vm280, 0.0
        %284 = vst.msk [vmem:[#allocation4 + $0x18] sm:$0xff] %vm280, 0.0
      $region36: #{multi_head_attention.4} parent=31 // pred_fallthru
        _
      %v285 = vld [vmem:[%s242] sm:$0xf]
      %v286 = vld [vmem:[%s250] sm:$0xf]
      %v287 = vld [vmem:[%s258] sm:$0xf]
      %vm288 = vcmask 64512
      %v290 = vsel %vm288, %v285, 0
      %v293 = vsel %vm288, %v286, 0
      %295 = vmatprep.subr.bf16.mxu0 0
      %296 = vmatpush1.bf16.xpose.msra.mxu0 0
      %297 = vmatprep.subr.bf16.mxu0 0
      %298 = vmatpush1.bf16.xpose.msra.mxu0 0
      %299 = vmatprep.subr.bf16.mxu0 0
      %300 = vmatpush1.bf16.xpose.msra.mxu0 0
      %301 = vmatprep.subr.bf16.mxu0 0
      %302 = vmatpush1.bf16.xpose.msra.mxu0 0
      %303 = vmatprep.subr.bf16.mxu0 0
      %304 = vmatpush1.bf16.xpose.msra.mxu0 0
      %305 = vmatprep.subr.bf16.mxu0 0
      %306 = vmatpush1.bf16.xpose.msra.mxu0 0
      %307 = vmatprep.subr.bf16.mxu0 0
      %308 = vmatpush1.bf16.xpose.msra.mxu0 0
      %309 = vmatprep.subr.bf16.mxu0 0
      %310 = vmatpush1.bf16.xpose.msra.mxu0 %v293
      %311 = vmatprep.subr.bf16.mxu0 0
      %312 = vmatpush2.bf16.xpose.msra.mxu0 0
      %313 = vmatprep.subr.bf16.mxu0 0
      %314 = vmatpush2.bf16.xpose.msra.mxu0 0
      %315 = vmatprep.subr.bf16.mxu0 0
      %316 = vmatpush2.bf16.xpose.msra.mxu0 0
      %317 = vmatprep.subr.bf16.mxu0 0
      %318 = vmatpush2.bf16.xpose.msra.mxu0 0
      %319 = vmatprep.subr.bf16.mxu0 0
      %320 = vmatpush2.bf16.xpose.msra.mxu0 0
      %321 = vmatprep.subr.bf16.mxu0 0
      %322 = vmatpush2.bf16.xpose.msra.mxu0 0
      %323 = vmatprep.subr.bf16.mxu0 0
      %324 = vmatpush2.bf16.xpose.msra.mxu0 0
      %325 = vmatprep.subr.bf16.mxu0 0
      %326 = vmatpush2.bf16.xpose.msra.mxu0 0
      %327 = vmatprep.mubr.bf16.mxu0 0
      %328 = vmatmul.mubr.bf16.gmra.mxu0 %v290
      %v329 = vpop.f32.mrf.mxu0
      %v330 = vadd.f32 0.0, %v329
      %v331 = vpop.f32.mrf.mxu0
      %v332 = vpop.f32.mrf.mxu0
      %v333 = vpop.f32.mrf.mxu0
      %334 = vdwg.mxu0
      %v335 = vld [vmem:[#allocation2] sm:$0xff]
      %v336 = vsel %vm288, %v330, -inf
      %337 = vmax.xlane.f32.xlu0 %v336
      %v338 = vpop.xlane.xlu0 %337
      %v339 = vmax.f32 %v335, %v338
      %v340 = vsub.f32 %v335, %v339
      %v341 = vmul.f32 %v340, 1.442695
      %v342 = vpow.pop %v341
      %344 = vset.pattern.permute.xlu0 0
      %345 = vperm.xlu0 %344, %v339
      %v346 = vpop.permute.xlu0 %345
      %v348 = vsub.f32 %v330, %v346
      %v349 = vmul.f32 %v348, 1.442695
      %v350 = vpow.pop %v349
      %v351 = vld [vmem:[#allocation3] sm:$0xff]
      %v352 = vmul.f32 %v342, %v351
      %v353 = vsel %vm288, %v350, 0.0
      %354 = vadd.xlane.f32.xlu0 %v353
      %v355 = vpop.xlane.xlu0 %354
      %v356 = vadd.f32 %v352, %v355
      %vm357 = vcmask 7168
      %358 = vst.msk [vmem:[#allocation3] sm:$0xff] %vm357, %v356
      %v359 = vld [vmem:[#allocation4] sm:$0xff]
      %361 = vset.pattern.permute.xlu0 0
      %362 = vperm.xlu0 %361, %v342
      %v363 = vpop.permute.xlu0 %362
      %v365 = vmul.f32 %v363, %v359
      %v366 = vpack.c.bf16 %v350, %v350
      %v368 = vsel %vm288, %v366, 0
      %vm370 = vcmask 1043456
      %v372 = vsel %vm370, %v287, 0
      %374 = vmatprep.subr.bf16.mxu0 0
      %375 = vmatpush1.bf16.msra.mxu0 0
      %376 = vmatprep.subr.bf16.mxu0 0
      %377 = vmatpush1.bf16.msra.mxu0 0
      %378 = vmatprep.subr.bf16.mxu0 0
      %379 = vmatpush1.bf16.msra.mxu0 0
      %380 = vmatprep.subr.bf16.mxu0 0
      %381 = vmatpush1.bf16.msra.mxu0 0
      %382 = vmatprep.subr.bf16.mxu0 0
      %383 = vmatpush1.bf16.msra.mxu0 0
      %384 = vmatprep.subr.bf16.mxu0 0
      %385 = vmatpush1.bf16.msra.mxu0 0
      %386 = vmatprep.subr.bf16.mxu0 0
      %387 = vmatpush1.bf16.msra.mxu0 0
      %388 = vmatprep.subr.bf16.mxu0 0
      %389 = vmatpush1.bf16.msra.mxu0 %v372
      %390 = vmatprep.subr.bf16.mxu0 0
      %391 = vmatpush2.bf16.msra.mxu0 0
      %392 = vmatprep.subr.bf16.mxu0 0
      %393 = vmatpush2.bf16.msra.mxu0 0
      %394 = vmatprep.subr.bf16.mxu0 0
      %395 = vmatpush2.bf16.msra.mxu0 0
      %396 = vmatprep.subr.bf16.mxu0 0
      %397 = vmatpush2.bf16.msra.mxu0 0
      %398 = vmatprep.subr.bf16.mxu0 0
      %399 = vmatpush2.bf16.msra.mxu0 0
      %400 = vmatprep.subr.bf16.mxu0 0
      %401 = vmatpush2.bf16.msra.mxu0 0
      %402 = vmatprep.subr.bf16.mxu0 0
      %403 = vmatpush2.bf16.msra.mxu0 0
      %404 = vmatprep.subr.bf16.mxu0 0
      %405 = vmatpush2.bf16.msra.mxu0 0
      %406 = vmatprep.mubr.bf16.mxu0 0
      %407 = vmatmul.mubr.bf16.gmra.mxu0 %v368
      %v408 = vpop.f32.mrf.mxu0
      %v409 = vadd.f32 0.0, %v408
      %v410 = vpop.f32.mrf.mxu0
      %v411 = vpop.f32.mrf.mxu0
      %v412 = vpop.f32.mrf.mxu0
      %413 = vdwg.mxu0
      %v414 = vadd.f32 %v365, %v409
      %415 = vst.msk [vmem:[#allocation4] sm:$0xff] %vm288, %v414
      %416 = vst.msk [vmem:[#allocation2] sm:$0xff] %vm357, %v339
      %v418 = vunpack.c.l.b16 %v285
      %v419 = vpack.c.b16 %v418, %v418
      %420 = vrot.lane.b32.xlu0 %v419, 120
      %v421 = vpop.permute.xlu0 %420
      %v423 = vunpack.c.l.b16 %v286
      %v424 = vpack.c.b16 %v423, %v423
      %425 = vrot.lane.b32.xlu0 %v424, 120
      %v426 = vpop.permute.xlu0 %425
      %v428 = vsel %vm288, %v421, 0
      %v431 = vsel %vm288, %v426, 0
      %433 = vmatprep.subr.bf16.mxu0 0
      %434 = vmatpush1.bf16.xpose.msra.mxu0 0
      %435 = vmatprep.subr.bf16.mxu0 0
      %436 = vmatpush1.bf16.xpose.msra.mxu0 0
      %437 = vmatprep.subr.bf16.mxu0 0
      %438 = vmatpush1.bf16.xpose.msra.mxu0 0
      %439 = vmatprep.subr.bf16.mxu0 0
      %440 = vmatpush1.bf16.xpose.msra.mxu0 0
      %441 = vmatprep.subr.bf16.mxu0 0
      %442 = vmatpush1.bf16.xpose.msra.mxu0 0
      %443 = vmatprep.subr.bf16.mxu0 0
      %444 = vmatpush1.bf16.xpose.msra.mxu0 0
      %445 = vmatprep.subr.bf16.mxu0 0
      %446 = vmatpush1.bf16.xpose.msra.mxu0 0
      %447 = vmatprep.subr.bf16.mxu0 0
      %448 = vmatpush1.bf16.xpose.msra.mxu0 %v431
      %449 = vmatprep.subr.bf16.mxu0 0
      %450 = vmatpush2.bf16.xpose.msra.mxu0 0
      %451 = vmatprep.subr.bf16.mxu0 0
      %452 = vmatpush2.bf16.xpose.msra.mxu0 0
      %453 = vmatprep.subr.bf16.mxu0 0
      %454 = vmatpush2.bf16.xpose.msra.mxu0 0
      %455 = vmatprep.subr.bf16.mxu0 0
      %456 = vmatpush2.bf16.xpose.msra.mxu0 0
      %457 = vmatprep.subr.bf16.mxu0 0
      %458 = vmatpush2.bf16.xpose.msra.mxu0 0
      %459 = vmatprep.subr.bf16.mxu0 0
      %460 = vmatpush2.bf16.xpose.msra.mxu0 0
      %461 = vmatprep.subr.bf16.mxu0 0
      %462 = vmatpush2.bf16.xpose.msra.mxu0 0
      %463 = vmatprep.subr.bf16.mxu0 0
      %464 = vmatpush2.bf16.xpose.msra.mxu0 0
      %465 = vmatprep.mubr.bf16.mxu0 0
      %466 = vmatmul.mubr.bf16.gmra.mxu0 %v428
      %v467 = vpop.f32.mrf.mxu0
      %v468 = vadd.f32 0.0, %v467
      %v469 = vpop.f32.mrf.mxu0
      %v470 = vpop.f32.mrf.mxu0
      %v471 = vpop.f32.mrf.mxu0
      %472 = vdwg.mxu0
      %s473 = scalar_lea.vmem [#allocation2], 8
      %v474 = vld [vmem:[%s473] sm:$0xff]
      %v475 = vsel %vm288, %v468, -inf
      %476 = vmax.xlane.f32.xlu0 %v475
      %v477 = vpop.xlane.xlu0 %476
      %v478 = vmax.f32 %v474, %v477
      %v479 = vsub.f32 %v474, %v478
      %v480 = vmul.f32 %v479, 1.442695
      %v481 = vpow.pop %v480
      %483 = vset.pattern.permute.xlu0 0
      %484 = vperm.xlu0 %483, %v478
      %v485 = vpop.permute.xlu0 %484
      %v487 = vsub.f32 %v468, %v485
      %v488 = vmul.f32 %v487, 1.442695
      %v489 = vpow.pop %v488
      %s490 = scalar_lea.vmem [#allocation3], 8
      %v491 = vld [vmem:[%s490] sm:$0xff]
      %v492 = vmul.f32 %v481, %v491
      %v493 = vsel %vm288, %v489, 0.0
      %494 = vadd.xlane.f32.xlu0 %v493
      %v495 = vpop.xlane.xlu0 %494
      %v496 = vadd.f32 %v492, %v495
      %497 = vst.msk [vmem:[%s490] sm:$0xff] %vm357, %v496
      %s498 = scalar_lea.vmem [#allocation4], 8
      %v499 = vld [vmem:[%s498] sm:$0xff]
      %501 = vset.pattern.permute.xlu0 0
      %502 = vperm.xlu0 %501, %v481
      %v503 = vpop.permute.xlu0 %502
      %v505 = vmul.f32 %v503, %v499
      %v506 = vpack.c.bf16 %v489, %v489
      %v508 = vunpack.c.l.b16 %v287
      %v509 = vpack.c.b16 %v508, %v508
      %510 = vrot.lane.b32.xlu0 %v509, 120
      %v511 = vpop.permute.xlu0 %510
      %v513 = vsel %vm288, %v506, 0
      %v516 = vsel %vm370, %v511, 0
      %518 = vmatprep.subr.bf16.mxu0 0
      %519 = vmatpush1.bf16.msra.mxu0 0
      %520 = vmatprep.subr.bf16.mxu0 0
      %521 = vmatpush1.bf16.msra.mxu0 0
      %522 = vmatprep.subr.bf16.mxu0 0
      %523 = vmatpush1.bf16.msra.mxu0 0
      %524 = vmatprep.subr.bf16.mxu0 0
      %525 = vmatpush1.bf16.msra.mxu0 0
      %526 = vmatprep.subr.bf16.mxu0 0
      %527 = vmatpush1.bf16.msra.mxu0 0
      %528 = vmatprep.subr.bf16.mxu0 0
      %529 = vmatpush1.bf16.msra.mxu0 0
      %530 = vmatprep.subr.bf16.mxu0 0
      %531 = vmatpush1.bf16.msra.mxu0 0
      %532 = vmatprep.subr.bf16.mxu0 0
      %533 = vmatpush1.bf16.msra.mxu0 %v516
      %534 = vmatprep.subr.bf16.mxu0 0
      %535 = vmatpush2.bf16.msra.mxu0 0
      %536 = vmatprep.subr.bf16.mxu0 0
      %537 = vmatpush2.bf16.msra.mxu0 0
      %538 = vmatprep.subr.bf16.mxu0 0
      %539 = vmatpush2.bf16.msra.mxu0 0
      %540 = vmatprep.subr.bf16.mxu0 0
      %541 = vmatpush2.bf16.msra.mxu0 0
      %542 = vmatprep.subr.bf16.mxu0 0
      %543 = vmatpush2.bf16.msra.mxu0 0
      %544 = vmatprep.subr.bf16.mxu0 0
      %545 = vmatpush2.bf16.msra.mxu0 0
      %546 = vmatprep.subr.bf16.mxu0 0
      %547 = vmatpush2.bf16.msra.mxu0 0
      %548 = vmatprep.subr.bf16.mxu0 0
      %549 = vmatpush2.bf16.msra.mxu0 0
      %550 = vmatprep.mubr.bf16.mxu0 0
      %551 = vmatmul.mubr.bf16.gmra.mxu0 %v513
      %v552 = vpop.f32.mrf.mxu0
      %v553 = vadd.f32 0.0, %v552
      %v554 = vpop.f32.mrf.mxu0
      %v555 = vpop.f32.mrf.mxu0
      %v556 = vpop.f32.mrf.mxu0
      %557 = vdwg.mxu0
      %v558 = vadd.f32 %v505, %v553
      %559 = vst.msk [vmem:[%s498] sm:$0xff] %vm288, %v558
      %560 = vst.msk [vmem:[%s473] sm:$0xff] %vm357, %v478
      %561 = vrot.lane.b32.xlu0 %v419, 112
      %v562 = vpop.permute.xlu0 %561
      %563 = vrot.lane.b32.xlu0 %v424, 112
      %v564 = vpop.permute.xlu0 %563
      %v566 = vsel %vm288, %v562, 0
      %v569 = vsel %vm288, %v564, 0
      %571 = vmatprep.subr.bf16.mxu0 0
      %572 = vmatpush1.bf16.xpose.msra.mxu0 0
      %573 = vmatprep.subr.bf16.mxu0 0
      %574 = vmatpush1.bf16.xpose.msra.mxu0 0
      %575 = vmatprep.subr.bf16.mxu0 0
      %576 = vmatpush1.bf16.xpose.msra.mxu0 0
      %577 = vmatprep.subr.bf16.mxu0 0
      %578 = vmatpush1.bf16.xpose.msra.mxu0 0
      %579 = vmatprep.subr.bf16.mxu0 0
      %580 = vmatpush1.bf16.xpose.msra.mxu0 0
      %581 = vmatprep.subr.bf16.mxu0 0
      %582 = vmatpush1.bf16.xpose.msra.mxu0 0
      %583 = vmatprep.subr.bf16.mxu0 0
      %584 = vmatpush1.bf16.xpose.msra.mxu0 0
      %585 = vmatprep.subr.bf16.mxu0 0
      %586 = vmatpush1.bf16.xpose.msra.mxu0 %v569
      %587 = vmatprep.subr.bf16.mxu0 0
      %588 = vmatpush2.bf16.xpose.msra.mxu0 0
      %589 = vmatprep.subr.bf16.mxu0 0
      %590 = vmatpush2.bf16.xpose.msra.mxu0 0
      %591 = vmatprep.subr.bf16.mxu0 0
      %592 = vmatpush2.bf16.xpose.msra.mxu0 0
      %593 = vmatprep.subr.bf16.mxu0 0
      %594 = vmatpush2.bf16.xpose.msra.mxu0 0
      %595 = vmatprep.subr.bf16.mxu0 0
      %596 = vmatpush2.bf16.xpose.msra.mxu0 0
      %597 = vmatprep.subr.bf16.mxu0 0
      %598 = vmatpush2.bf16.xpose.msra.mxu0 0
      %599 = vmatprep.subr.bf16.mxu0 0
      %600 = vmatpush2.bf16.xpose.msra.mxu0 0
      %601 = vmatprep.subr.bf16.mxu0 0
      %602 = vmatpush2.bf16.xpose.msra.mxu0 0
      %603 = vmatprep.mubr.bf16.mxu0 0
      %604 = vmatmul.mubr.bf16.gmra.mxu0 %v566
      %v605 = vpop.f32.mrf.mxu0
      %v606 = vadd.f32 0.0, %v605
      %v607 = vpop.f32.mrf.mxu0
      %v608 = vpop.f32.mrf.mxu0
      %v609 = vpop.f32.mrf.mxu0
      %610 = vdwg.mxu0
      %s611 = scalar_lea.vmem [#allocation2], 16
      %v612 = vld [vmem:[%s611] sm:$0xff]
      %v613 = vsel %vm288, %v606, -inf
      %614 = vmax.xlane.f32.xlu0 %v613
      %v615 = vpop.xlane.xlu0 %614
      %v616 = vmax.f32 %v612, %v615
      %v617 = vsub.f32 %v612, %v616
      %v618 = vmul.f32 %v617, 1.442695
      %v619 = vpow.pop %v618
      %621 = vset.pattern.permute.xlu0 0
      %622 = vperm.xlu0 %621, %v616
      %v623 = vpop.permute.xlu0 %622
      %v625 = vsub.f32 %v606, %v623
      %v626 = vmul.f32 %v625, 1.442695
      %v627 = vpow.pop %v626
      %s628 = scalar_lea.vmem [#allocation3], 16
      %v629 = vld [vmem:[%s628] sm:$0xff]
      %v630 = vmul.f32 %v619, %v629
      %v631 = vsel %vm288, %v627, 0.0
      %632 = vadd.xlane.f32.xlu0 %v631
      %v633 = vpop.xlane.xlu0 %632
      %v634 = vadd.f32 %v630, %v633
      %635 = vst.msk [vmem:[%s628] sm:$0xff] %vm357, %v634
      %s636 = scalar_lea.vmem [#allocation4], 16
      %v637 = vld [vmem:[%s636] sm:$0xff]
      %639 = vset.pattern.permute.xlu0 0
      %640 = vperm.xlu0 %639, %v619
      %v641 = vpop.permute.xlu0 %640
      %v643 = vmul.f32 %v641, %v637
      %v644 = vpack.c.bf16 %v627, %v627
      %645 = vrot.lane.b32.xlu0 %v509, 112
      %v646 = vpop.permute.xlu0 %645
      %v648 = vsel %vm288, %v644, 0
      %v651 = vsel %vm370, %v646, 0
      %653 = vmatprep.subr.bf16.mxu0 0
      %654 = vmatpush1.bf16.msra.mxu0 0
      %655 = vmatprep.subr.bf16.mxu0 0
      %656 = vmatpush1.bf16.msra.mxu0 0
      %657 = vmatprep.subr.bf16.mxu0 0
      %658 = vmatpush1.bf16.msra.mxu0 0
      %659 = vmatprep.subr.bf16.mxu0 0
      %660 = vmatpush1.bf16.msra.mxu0 0
      %661 = vmatprep.subr.bf16.mxu0 0
      %662 = vmatpush1.bf16.msra.mxu0 0
      %663 = vmatprep.subr.bf16.mxu0 0
      %664 = vmatpush1.bf16.msra.mxu0 0
      %665 = vmatprep.subr.bf16.mxu0 0
      %666 = vmatpush1.bf16.msra.mxu0 0
      %667 = vmatprep.subr.bf16.mxu0 0
      %668 = vmatpush1.bf16.msra.mxu0 %v651
      %669 = vmatprep.subr.bf16.mxu0 0
      %670 = vmatpush2.bf16.msra.mxu0 0
      %671 = vmatprep.subr.bf16.mxu0 0
      %672 = vmatpush2.bf16.msra.mxu0 0
      %673 = vmatprep.subr.bf16.mxu0 0
      %674 = vmatpush2.bf16.msra.mxu0 0
      %675 = vmatprep.subr.bf16.mxu0 0
      %676 = vmatpush2.bf16.msra.mxu0 0
      %677 = vmatprep.subr.bf16.mxu0 0
      %678 = vmatpush2.bf16.msra.mxu0 0
      %679 = vmatprep.subr.bf16.mxu0 0
      %680 = vmatpush2.bf16.msra.mxu0 0
      %681 = vmatprep.subr.bf16.mxu0 0
      %682 = vmatpush2.bf16.msra.mxu0 0
      %683 = vmatprep.subr.bf16.mxu0 0
      %684 = vmatpush2.bf16.msra.mxu0 0
      %685 = vmatprep.mubr.bf16.mxu0 0
      %686 = vmatmul.mubr.bf16.gmra.mxu0 %v648
      %v687 = vpop.f32.mrf.mxu0
      %v688 = vadd.f32 0.0, %v687
      %v689 = vpop.f32.mrf.mxu0
      %v690 = vpop.f32.mrf.mxu0
      %v691 = vpop.f32.mrf.mxu0
      %692 = vdwg.mxu0
      %v693 = vadd.f32 %v643, %v688
      %694 = vst.msk [vmem:[%s636] sm:$0xff] %vm288, %v693
      %695 = vst.msk [vmem:[%s611] sm:$0xff] %vm357, %v616
      %696 = vrot.lane.b32.xlu0 %v419, 104
      %v697 = vpop.permute.xlu0 %696
      %698 = vrot.lane.b32.xlu0 %v424, 104
      %v699 = vpop.permute.xlu0 %698
      %v701 = vsel %vm288, %v697, 0
      %v704 = vsel %vm288, %v699, 0
      %706 = vmatprep.subr.bf16.mxu0 0
      %707 = vmatpush1.bf16.xpose.msra.mxu0 0
      %708 = vmatprep.subr.bf16.mxu0 0
      %709 = vmatpush1.bf16.xpose.msra.mxu0 0
      %710 = vmatprep.subr.bf16.mxu0 0
      %711 = vmatpush1.bf16.xpose.msra.mxu0 0
      %712 = vmatprep.subr.bf16.mxu0 0
      %713 = vmatpush1.bf16.xpose.msra.mxu0 0
      %714 = vmatprep.subr.bf16.mxu0 0
      %715 = vmatpush1.bf16.xpose.msra.mxu0 0
      %716 = vmatprep.subr.bf16.mxu0 0
      %717 = vmatpush1.bf16.xpose.msra.mxu0 0
      %718 = vmatprep.subr.bf16.mxu0 0
      %719 = vmatpush1.bf16.xpose.msra.mxu0 0
      %720 = vmatprep.subr.bf16.mxu0 0
      %721 = vmatpush1.bf16.xpose.msra.mxu0 %v704
      %722 = vmatprep.subr.bf16.mxu0 0
      %723 = vmatpush2.bf16.xpose.msra.mxu0 0
      %724 = vmatprep.subr.bf16.mxu0 0
      %725 = vmatpush2.bf16.xpose.msra.mxu0 0
      %726 = vmatprep.subr.bf16.mxu0 0
      %727 = vmatpush2.bf16.xpose.msra.mxu0 0
      %728 = vmatprep.subr.bf16.mxu0 0
      %729 = vmatpush2.bf16.xpose.msra.mxu0 0
      %730 = vmatprep.subr.bf16.mxu0 0
      %731 = vmatpush2.bf16.xpose.msra.mxu0 0
      %732 = vmatprep.subr.bf16.mxu0 0
      %733 = vmatpush2.bf16.xpose.msra.mxu0 0
      %734 = vmatprep.subr.bf16.mxu0 0
      %735 = vmatpush2.bf16.xpose.msra.mxu0 0
      %736 = vmatprep.subr.bf16.mxu0 0
      %737 = vmatpush2.bf16.xpose.msra.mxu0 0
      %738 = vmatprep.mubr.bf16.mxu0 0
      %739 = vmatmul.mubr.bf16.gmra.mxu0 %v701
      %v740 = vpop.f32.mrf.mxu0
      %v741 = vadd.f32 0.0, %v740
      %v742 = vpop.f32.mrf.mxu0
      %v743 = vpop.f32.mrf.mxu0
      %v744 = vpop.f32.mrf.mxu0
      %745 = vdwg.mxu0
      %s746 = scalar_lea.vmem [#allocation2], 24
      %v747 = vld [vmem:[%s746] sm:$0xff]
      %v748 = vsel %vm288, %v741, -inf
      %749 = vmax.xlane.f32.xlu0 %v748
      %v750 = vpop.xlane.xlu0 %749
      %v751 = vmax.f32 %v747, %v750
      %v752 = vsub.f32 %v747, %v751
      %v753 = vmul.f32 %v752, 1.442695
      %v754 = vpow.pop %v753
      %756 = vset.pattern.permute.xlu0 0
      %757 = vperm.xlu0 %756, %v751
      %v758 = vpop.permute.xlu0 %757
      %v760 = vsub.f32 %v741, %v758
      %v761 = vmul.f32 %v760, 1.442695
      %v762 = vpow.pop %v761
      %s763 = scalar_lea.vmem [#allocation3], 24
      %v764 = vld [vmem:[%s763] sm:$0xff]
      %v765 = vmul.f32 %v754, %v764
      %v766 = vsel %vm288, %v762, 0.0
      %767 = vadd.xlane.f32.xlu0 %v766
      %v768 = vpop.xlane.xlu0 %767
      %v769 = vadd.f32 %v765, %v768
      %770 = vst.msk [vmem:[%s763] sm:$0xff] %vm357, %v769
      %s771 = scalar_lea.vmem [#allocation4], 24
      %v772 = vld [vmem:[%s771] sm:$0xff]
      %774 = vset.pattern.permute.xlu0 0
      %775 = vperm.xlu0 %774, %v754
      %v776 = vpop.permute.xlu0 %775
      %v778 = vmul.f32 %v776, %v772
      %v779 = vpack.c.bf16 %v762, %v762
      %780 = vrot.lane.b32.xlu0 %v509, 104
      %v781 = vpop.permute.xlu0 %780
      %v783 = vsel %vm288, %v779, 0
      %v786 = vsel %vm370, %v781, 0
      %788 = vmatprep.subr.bf16.mxu0 0
      %789 = vmatpush1.bf16.msra.mxu0 0
      %790 = vmatprep.subr.bf16.mxu0 0
      %791 = vmatpush1.bf16.msra.mxu0 0
      %792 = vmatprep.subr.bf16.mxu0 0
      %793 = vmatpush1.bf16.msra.mxu0 0
      %794 = vmatprep.subr.bf16.mxu0 0
      %795 = vmatpush1.bf16.msra.mxu0 0
      %796 = vmatprep.subr.bf16.mxu0 0
      %797 = vmatpush1.bf16.msra.mxu0 0
      %798 = vmatprep.subr.bf16.mxu0 0
      %799 = vmatpush1.bf16.msra.mxu0 0
      %800 = vmatprep.subr.bf16.mxu0 0
      %801 = vmatpush1.bf16.msra.mxu0 0
      %802 = vmatprep.subr.bf16.mxu0 0
      %803 = vmatpush1.bf16.msra.mxu0 %v786
      %804 = vmatprep.subr.bf16.mxu0 0
      %805 = vmatpush2.bf16.msra.mxu0 0
      %806 = vmatprep.subr.bf16.mxu0 0
      %807 = vmatpush2.bf16.msra.mxu0 0
      %808 = vmatprep.subr.bf16.mxu0 0
      %809 = vmatpush2.bf16.msra.mxu0 0
      %810 = vmatprep.subr.bf16.mxu0 0
      %811 = vmatpush2.bf16.msra.mxu0 0
      %812 = vmatprep.subr.bf16.mxu0 0
      %813 = vmatpush2.bf16.msra.mxu0 0
      %814 = vmatprep.subr.bf16.mxu0 0
      %815 = vmatpush2.bf16.msra.mxu0 0
      %816 = vmatprep.subr.bf16.mxu0 0
      %817 = vmatpush2.bf16.msra.mxu0 0
      %818 = vmatprep.subr.bf16.mxu0 0
      %819 = vmatpush2.bf16.msra.mxu0 0
      %820 = vmatprep.mubr.bf16.mxu0 0
      %821 = vmatmul.mubr.bf16.gmra.mxu0 %v783
      %v822 = vpop.f32.mrf.mxu0
      %v823 = vadd.f32 0.0, %v822
      %v824 = vpop.f32.mrf.mxu0
      %v825 = vpop.f32.mrf.mxu0
      %v826 = vpop.f32.mrf.mxu0
      %827 = vdwg.mxu0
      %v828 = vadd.f32 %v778, %v823
      %829 = vst.msk [vmem:[%s771] sm:$0xff] %vm288, %v828
      %830 = vst.msk [vmem:[%s746] sm:$0xff] %vm357, %v751
      // Predicated region
      $region37: #{multi_head_attention.4} parent=31 // pred_check
        %p831 = pneg %p267
      $region38: #{multi_head_attention.4} parent=31 // pred_check_branch
        %833 = sbr.rel (%p831) target = $region40
      $region39: #{multi_head_attention.4} parent=31 // pred_region
        %v834 = vld [vmem:[#allocation3] sm:$0xff]
        %v835 = vrcp.pop %v834
        %v836 = vld [vmem:[#allocation4] sm:$0xff]
        %838 = vset.pattern.permute.xlu0 0
        %839 = vperm.xlu0 %838, %v835
        %v840 = vpop.permute.xlu0 %839
        %v842 = vmul.f32 %v836, %v840
        %v843 = vld [vmem:[%s490] sm:$0xff]
        %v844 = vrcp.pop %v843
        %v845 = vld [vmem:[%s498] sm:$0xff]
        %847 = vset.pattern.permute.xlu0 0
        %848 = vperm.xlu0 %847, %v844
        %v849 = vpop.permute.xlu0 %848
        %v851 = vmul.f32 %v845, %v849
        %v852 = vld [vmem:[%s628] sm:$0xff]
        %v853 = vrcp.pop %v852
        %v854 = vld [vmem:[%s636] sm:$0xff]
        %856 = vset.pattern.permute.xlu0 0
        %857 = vperm.xlu0 %856, %v853
        %v858 = vpop.permute.xlu0 %857
        %v860 = vmul.f32 %v854, %v858
        %v861 = vld [vmem:[%s763] sm:$0xff]
        %v862 = vrcp.pop %v861
        %v863 = vld [vmem:[%s771] sm:$0xff]
        %865 = vset.pattern.permute.xlu0 0
        %866 = vperm.xlu0 %865, %v862
        %v867 = vpop.permute.xlu0 %866
        %v869 = vmul.f32 %v863, %v867
        %871 = vrot.lane.b32.xlu0 %v851, 8
        %v872 = vpop.permute.xlu0 %871
        %875 = vrot.lane.b32.xlu0 %v860, 16
        %v876 = vpop.permute.xlu0 %875
        %879 = vrot.lane.b32.xlu0 %v869, 24
        %v880 = vpop.permute.xlu0 %879
        %v882 = vsel %vm288, %v842, %v872
        %vm883 = vcmask 130048
        %v884 = vsel %vm883, %v882, %v876
        %vm885 = vcmask 195584
        %v886 = vsel %vm885, %v884, %v880
        %v887 = vpack.c.bf16 %v886, %v886
        %vm888 = vcmask 257024
        %889 = vst.msk [vmem:[%s265] sm:$0xf] %vm888, %v887
      $region40: #{multi_head_attention.4} parent=31 // pred_fallthru
        _
      %p890 = scmp.lt.s32.totalorder %s19, 1
      %s891 = scalar_select %p890, %s19, 1
      %p892 = scmp.lt.s32.totalorder %s20, 0
      %s893 = scalar_select %p892, %s20, 0
      %s894 = sadd.s32 %s893, %s891
      %s895 = smul.addr %s894, 4
      %s896 = scalar_lea.vmem %s3, %s895
      // Predicated region
      $region41: #{multi_head_attention.4} parent=31 // pred_check
        %p897 = pneg %p137
      $region42: #{multi_head_attention.4} parent=31 // pred_check_branch
        %899 = sbr.rel (%p897) target = $region44
      $region43: #{multi_head_attention.4} parent=31 // pred_region
        _
      $region44: #{multi_head_attention.4} parent=31 // pred_fallthru
        _
    $region32: #{multi_head_attention.4} parent=5 // pred_fallthru
      _
    %p900 = scmp.le.s32.totalorder 2, %s9
    // Predicated region
    $region45: #{multi_head_attention.4} parent=5 // pred_check
      %p901 = pneg %p900
    $region46: #{multi_head_attention.4} parent=5 // pred_check_branch
      %903 = sbr.rel (%p901) target = $region48
    $region47: #{multi_head_attention.4} parent=5 // pred_region
      %s904 = ssub.s32 %s9, 2
      // Predicated region
      $region49: #{multi_head_attention.4} parent=47 // pred_check
        %p905 = pneg %p143
      $region50: #{multi_head_attention.4} parent=47 // pred_check_branch
        %907 = sbr.rel (%p905) target = $region52
      $region51: #{multi_head_attention.4} parent=47 // pred_region
        %p908 = scmp.lt.s32.totalorder %s22, 1
        %s909 = scalar_select %p908, %s22, 1
        %p910 = scmp.lt.s32.totalorder %s23, 0
        %s911 = scalar_select %p910, %s23, 0
        %s912 = sadd.s32 %s911, %s909
        %s913 = smul.addr %s912, 4
        %s914 = scalar_lea.vmem %s3, %s913
      $region52: #{multi_head_attention.4} parent=47 // pred_fallthru
        _
    $region48: #{multi_head_attention.4} parent=5 // pred_fallthru
      _
  $region6: #{multi_head_attention.4} parent=0 // loop_footer
    %s13 = sadd.s32 1, %s9
  $region7: #{multi_head_attention.4} parent=0 // loop_footer_branch
    %8 = sbr.rel target = $region3
  $region8: #{multi_head_attention.4} parent=0 // loop_exit
    _

</llo_original>
